<compile_context>
chip_gen: v6e
topology: v6e:2x2x1
jax: 0.10.0
libtpu: 0.0.40
codegen_flags: <defaults>
</compile_context>

<pallas_src>
import functools

import jax
import jax.numpy as jnp
from jax.experimental import pallas as pl
from jax.experimental.pallas import tpu as pltpu


# ----------------------------------------------------------------------------
# Fused GRU + regression-head kernel (single grid step, everything VMEM-resident)
#
# Inputs:
#   x_ref    : (S*B, F)  time-major rows (row t*B + b)
#   wi_ref   : (F, 3H)   [W_ir | W_iz | W_in]^T   (pre-transposed, gate-fused)
#   wh_ref   : (H, 3H)   [W_hr | W_hz | W_hn]^T
#   bi_ref   : (1, 3H)   [b_ir+b_hr | b_iz+b_hz | b_in]
#   bh_ref   : (1, 3H)   [0 | 0 | b_hn]  (b_hn must sit inside r * (...))
#   wreg_ref : (H, F)    regression weight, pre-transposed
#   breg_ref : (1, F)    regression bias
# Output:
#   out_ref  : (S*B, F)  time-major rows
# Scratch:
#   gi_ref   : (S*B, 3H) precomputed input projection for all timesteps
#   hseq_ref : (S*B, H)  hidden state at every timestep (VMEM only, never HBM)
# ----------------------------------------------------------------------------
def gru_decoder_kernel(x_ref, wi_ref, wh_ref, bi_ref, bh_ref, wreg_ref, breg_ref,
                       out_ref, gi_ref, hseq_ref, *, batch, seq):
    B = batch
    S = seq
    H = wh_ref.shape[0]
    H3 = 3 * H

    # (1) Input projection for ALL timesteps as one MXU matmul, off the
    #     serial recurrence chain.
    gi_ref[...] = (jnp.dot(x_ref[...], wi_ref[...],
                           preferred_element_type=jnp.float32) + bi_ref[...])

    # Loop-invariant constants, loaded/broadcast once before the unrolled loop.
    wh = wh_ref[...]                                      # (H, 3H)
    bh = jnp.broadcast_to(bh_ref[...], (B, H3))           # (B, 3H): [0 | 0 | b_hn]

    h0 = jnp.zeros((B, H), jnp.float32)                   # PyTorch GRU, hidden=None

    def step(t, h):
        gi_t = gi_ref[pl.ds(t * B, B), :]                                # (B, 3H)
        gh = jnp.dot(h, wh, preferred_element_type=jnp.float32) + bh     # (B, 3H)
        g = gi_t + gh                                                    # full-width VALU add
        s = jax.nn.sigmoid(g)                                            # one EUP push (r|z lanes used)
        r = s[:, 0:H]
        z = s[:, H:2 * H]
        n = jnp.tanh(gi_t[:, 2 * H:] + r * gh[:, 2 * H:])
        h_new = (1.0 - z) * n + z * h                                    # (B, H)
        hseq_ref[pl.ds(t * B, B), :] = h_new
        return h_new

    # S is small here -> full unroll.  TODO(synk): partial unroll (e.g. 8) for long S.
    jax.lax.fori_loop(0, S, step, h0, unroll=True)

    # (2) Fused regression head: one MXU matmul over the whole hidden sequence.
    out_ref[...] = (jnp.dot(hseq_ref[...], wreg_ref[...],
                            preferred_element_type=jnp.float32)
                    + breg_ref[...]).astype(out_ref.dtype)


def fuse_params(p):
    """One-time host-side weight packing (pre-transpose, gate fusion, bias pre-sum)."""
    H = p["w_hr"].shape[0]
    wi = jnp.concatenate([p["w_ir"], p["w_iz"], p["w_in"]], axis=0).T   # (F, 3H)
    wh = jnp.concatenate([p["w_hr"], p["w_hz"], p["w_hn"]], axis=0).T   # (H, 3H)
    bi = jnp.concatenate([p["b_ir"] + p["b_hr"],
                          p["b_iz"] + p["b_hz"],
                          p["b_in"]], axis=-1)                          # (1, 3H)
    zeros = jnp.zeros((1, H), jnp.float32)
    bh = jnp.concatenate([zeros, zeros, p["b_hn"]], axis=-1)            # (1, 3H)
    return {
        "wi": wi, "wh": wh, "bi": bi, "bh": bh,
        "wreg_t": p["w_reg"].T,           # (H, F)
        "breg": p["b_reg"],               # (1, F)
    }


def decoder_forward(X, fp):
    """X: (B, S, F) float32 (batch_first, like the PyTorch module). Returns (B, S, F)."""
    B, S, F = X.shape
    H = fp["wh"].shape[0]
    H3 = 3 * H
    SB = S * B

    # Time-major flattening (tiny XLA op; a BlockSpec index_map cannot transpose).
    # Row layout: row t*B + b == (timestep t, batch b).
    x2d = jnp.transpose(X, (1, 0, 2)).reshape(SB, F)

    kernel = functools.partial(gru_decoder_kernel, batch=B, seq=S)

    out2d = pl.pallas_call(
        kernel,
        out_shape=jax.ShapeDtypeStruct((SB, F), jnp.float32),
        grid_spec=pltpu.PrefetchScalarGridSpec(
            num_scalar_prefetch=0,
            grid=(1,),
            in_specs=[
                pl.BlockSpec((SB, F), lambda i: (0, 0)),    # inputs, whole sequence resident
                pl.BlockSpec((F, H3), lambda i: (0, 0)),    # W_i fused
                pl.BlockSpec((H, H3), lambda i: (0, 0)),    # W_h fused
                pl.BlockSpec((1, H3), lambda i: (0, 0)),    # fused input-side biases
                pl.BlockSpec((1, H3), lambda i: (0, 0)),    # [0|0|b_hn]
                pl.BlockSpec((H, F), lambda i: (0, 0)),     # regression weight^T
                pl.BlockSpec((1, F), lambda i: (0, 0)),     # regression bias
            ],
            out_specs=pl.BlockSpec((SB, F), lambda i: (0, 0)),
            scratch_shapes=[
                pltpu.VMEM((SB, H3), jnp.float32),          # gi for all timesteps
                pltpu.VMEM((SB, H), jnp.float32),           # hidden sequence (VMEM only)
            ],
        ),
        compiler_params=pltpu.CompilerParams(
            dimension_semantics=("arbitrary",),
            vmem_limit_bytes=32 * 1024 * 1024,
        ),
    )(x2d, fp["wi"], fp["wh"], fp["bi"], fp["bh"], fp["wreg_t"], fp["breg"])

    return jnp.transpose(out2d.reshape(S, B, F), (1, 0, 2))             # (B, S, F)


def init_params(key, n_features, hidden_dim):
    """PyTorch-shaped GRU + Linear params, uniform(-1/sqrt(H), 1/sqrt(H))."""
    k = 1.0 / jnp.sqrt(jnp.float32(hidden_dim))
    names_shapes = [
        ("w_ir", (hidden_dim, n_features)), ("w_iz", (hidden_dim, n_features)),
        ("w_in", (hidden_dim, n_features)),
        ("w_hr", (hidden_dim, hidden_dim)), ("w_hz", (hidden_dim, hidden_dim)),
        ("w_hn", (hidden_dim, hidden_dim)),
        ("b_ir", (1, hidden_dim)), ("b_iz", (1, hidden_dim)), ("b_in", (1, hidden_dim)),
        ("b_hr", (1, hidden_dim)), ("b_hz", (1, hidden_dim)), ("b_hn", (1, hidden_dim)),
        ("w_reg", (n_features, hidden_dim)), ("b_reg", (1, n_features)),
    ]
    keys = jax.random.split(key, len(names_shapes))
    return {name: jax.random.uniform(kk, shape, jnp.float32, -k, k)
            for kk, (name, shape) in zip(keys, names_shapes)}


def decoder_reference(X, params):
    """Pure-JAX reference (lax.scan GRU + Linear) for correctness checking."""
    B, S, F = X.shape
    H = params["w_hr"].shape[0]
    h0 = jnp.zeros((B, H), jnp.float32)

    def step(h, x_t):
        i_r = x_t @ params["w_ir"].T + params["b_ir"]
        i_z = x_t @ params["w_iz"].T + params["b_iz"]
        i_n = x_t @ params["w_in"].T + params["b_in"]
        h_r = h @ params["w_hr"].T + params["b_hr"]
        h_z = h @ params["w_hz"].T + params["b_hz"]
        h_n = h @ params["w_hn"].T + params["b_hn"]
        r = jax.nn.sigmoid(i_r + h_r)
        z = jax.nn.sigmoid(i_z + h_z)
        n = jnp.tanh(i_n + r * h_n)
        h_new = (1.0 - z) * n + z * h
        return h_new, h_new

    _, h_seq = jax.lax.scan(step, h0, jnp.transpose(X, (1, 0, 2)))   # (S, B, H)
    out = h_seq @ params["w_reg"].T + params["b_reg"]                # (S, B, F)
    return jnp.transpose(out, (1, 0, 2))


if __name__ == "__main__":
    # Small shapes consistent with the module: batch=2, seq=8, n_features=4, hidden_dim=32.
    B, S, F, H = 2, 8, 4, 32
    key = jax.random.PRNGKey(0)
    k_x, k_p = jax.random.split(key)
    X = jax.random.normal(k_x, (B, S, F), jnp.float32)
    params = init_params(k_p, F, H)
    fused = fuse_params(params)

    fwd = jax.jit(decoder_forward)
    out = jax.block_until_ready(fwd(X, fused))

    ref = jax.block_until_ready(decoder_reference(X, params))
    assert out.shape == (B, S, F)
    assert jnp.allclose(out, ref, atol=1e-5, rtol=1e-5), "Pallas kernel mismatch vs reference"

    # TODO(synk): optional branches of Decoder (LSTM cell, extra stacked RNNs,
    # Batch/LayerNorm, dropout, MultiheadAttention) are inactive under the
    # default constructor args and are not lowered here.
    print("KERNEL_OK")
</pallas_src>

<mosaic_0001>
module attributes {stable_mosaic.version = 11 : i64} {
  func.func @gru_decoder_kernel(%arg0: i32, %arg1: memref<16x4xf32, #tpu.memory_space<vmem>>, %arg2: memref<4x96xf32, #tpu.memory_space<vmem>>, %arg3: memref<32x96xf32, #tpu.memory_space<vmem>>, %arg4: memref<1x96xf32, #tpu.memory_space<vmem>>, %arg5: memref<1x96xf32, #tpu.memory_space<vmem>>, %arg6: memref<32x4xf32, #tpu.memory_space<vmem>>, %arg7: memref<1x4xf32, #tpu.memory_space<vmem>>, %arg8: memref<16x4xf32, #tpu.memory_space<vmem>>, %arg9: memref<16x96xf32, #tpu.memory_space<vmem>>, %arg10: memref<16x32xf32, #tpu.memory_space<vmem>>) attributes {dimension_semantics = [#tpu.dimension_semantics<arbitrary>], iteration_bounds = array<i64: 1>, scalar_prefetch = 0 : i64, scratch_operands = 2 : i64, tpu.core_type = #tpu.core_type<tc>, window_params = [{pipeline_mode = #tpu.pipeline_mode<synchronous>, transform_indices = @transform_0, window_bounds = array<i64: 16, 4>}, {pipeline_mode = #tpu.pipeline_mode<synchronous>, transform_indices = @transform_1, window_bounds = array<i64: 4, 96>}, {pipeline_mode = #tpu.pipeline_mode<synchronous>, transform_indices = @transform_2, window_bounds = array<i64: 32, 96>}, {pipeline_mode = #tpu.pipeline_mode<synchronous>, transform_indices = @transform_3, window_bounds = array<i64: 1, 96>}, {pipeline_mode = #tpu.pipeline_mode<synchronous>, transform_indices = @transform_4, window_bounds = array<i64: 1, 96>}, {pipeline_mode = #tpu.pipeline_mode<synchronous>, transform_indices = @transform_5, window_bounds = array<i64: 32, 4>}, {pipeline_mode = #tpu.pipeline_mode<synchronous>, transform_indices = @transform_6, window_bounds = array<i64: 1, 4>}, {pipeline_mode = #tpu.pipeline_mode<synchronous>, transform_indices = @transform_7, window_bounds = array<i64: 16, 4>}]} {
    %c0 = arith.constant 0 : index
    %c0_0 = arith.constant 0 : index
    %0 = vector.load %arg1[%c0, %c0_0] : memref<16x4xf32, #tpu.memory_space<vmem>>, vector<16x4xf32>
    %c0_1 = arith.constant 0 : index
    %c0_2 = arith.constant 0 : index
    %1 = vector.load %arg2[%c0_1, %c0_2] : memref<4x96xf32, #tpu.memory_space<vmem>>, vector<4x96xf32>
    %cst = arith.constant dense<0.000000e+00> : vector<16x96xf32>
    %2 = tpu.matmul %0, %1, %cst {dimension_numbers = #tpu.dot_dimension_numbers<[1], [0], [0], [1], [0, 0, 1, 1], [], []>} : vector<16x4xf32>, vector<4x96xf32>, vector<16x96xf32> -> vector<16x96xf32>
    %c0_3 = arith.constant 0 : index
    %c0_4 = arith.constant 0 : index
    %3 = vector.load %arg4[%c0_3, %c0_4] : memref<1x96xf32, #tpu.memory_space<vmem>>, vector<1x96xf32>
    %4 = vector.broadcast %3 : vector<1x96xf32> to vector<16x96xf32>
    %5 = arith.addf %2, %4 : vector<16x96xf32>
    %c0_5 = arith.constant 0 : index
    %c0_6 = arith.constant 0 : index
    %6 = vector.load %arg9[%c0_5, %c0_6] : memref<16x96xf32, #tpu.memory_space<vmem>>, vector<16x96xf32>
    tpu.vector_store %arg9[%c0_5, %c0_6], %5 {strides = array<i32>} : memref<16x96xf32, #tpu.memory_space<vmem>>, vector<16x96xf32>,
    %c0_7 = arith.constant 0 : index
    %c0_8 = arith.constant 0 : index
    %7 = vector.load %arg3[%c0_7, %c0_8] : memref<32x96xf32, #tpu.memory_space<vmem>>, vector<32x96xf32>
    %c0_9 = arith.constant 0 : index
    %c0_10 = arith.constant 0 : index
    %8 = vector.load %arg5[%c0_9, %c0_10] : memref<1x96xf32, #tpu.memory_space<vmem>>, vector<1x96xf32>
    %9 = vector.shape_cast %8 : vector<1x96xf32> to vector<1x96xf32>
    %10 = vector.broadcast %9 : vector<1x96xf32> to vector<2x96xf32>
    %cst_11 = arith.constant 0.000000e+00 : f32
    %11 = vector.broadcast %cst_11 : f32 to vector<2x32xf32>
    %c0_i32 = arith.constant 0 : i32
    %c2_i32 = arith.constant 2 : i32
    %12 = arith.muli %c0_i32, %c2_i32 : i32
    %13 = arith.index_cast %12 : i32 to index
    %c0_12 = arith.constant 0 : index
    %14 = vector.load %arg9[%13, %c0_12] : memref<16x96xf32, #tpu.memory_space<vmem>>, vector<2x96xf32>
    %cst_13 = arith.constant dense<0.000000e+00> : vector<2x96xf32>
    %15 = tpu.matmul %11, %7, %cst_13 {dimension_numbers = #tpu.dot_dimension_numbers<[1], [0], [0], [1], [0, 0, 1, 1], [], []>} : vector<2x32xf32>, vector<32x96xf32>, vector<2x96xf32> -> vector<2x96xf32>
    %16 = arith.addf %15, %10 : vector<2x96xf32>
    %17 = arith.addf %14, %16 : vector<2x96xf32>
    %18 = arith.negf %17 : vector<2x96xf32>
    %19 = math.exp %18 : vector<2x96xf32>
    %cst_14 = arith.constant 1.000000e+00 : f32
    %20 = vector.broadcast %cst_14 : f32 to vector<2x96xf32>
    %21 = arith.addf %20, %19 : vector<2x96xf32>
    %22 = arith.divf %20, %21 : vector<2x96xf32>
    %23 = vector.extract_strided_slice %22 {offsets = [0, 0], sizes = [2, 32], strides = [1, 1]} : vector<2x96xf32> to vector<2x32xf32>
    %24 = vector.extract_strided_slice %22 {offsets = [0, 32], sizes = [2, 32], strides = [1, 1]} : vector<2x96xf32> to vector<2x32xf32>
    %25 = vector.extract_strided_slice %14 {offsets = [0, 64], sizes = [2, 32], strides = [1, 1]} : vector<2x96xf32> to vector<2x32xf32>
    %26 = vector.extract_strided_slice %16 {offsets = [0, 64], sizes = [2, 32], strides = [1, 1]} : vector<2x96xf32> to vector<2x32xf32>
    %27 = arith.mulf %23, %26 : vector<2x32xf32>
    %28 = arith.addf %25, %27 : vector<2x32xf32>
    %29 = math.tanh %28 : vector<2x32xf32>
    %cst_15 = arith.constant 1.000000e+00 : f32
    %30 = vector.broadcast %cst_15 : f32 to vector<2x32xf32>
    %31 = arith.subf %30, %24 : vector<2x32xf32>
    %32 = arith.mulf %31, %29 : vector<2x32xf32>
    %33 = arith.mulf %24, %11 : vector<2x32xf32>
    %34 = arith.addf %32, %33 : vector<2x32xf32>
    %c2_i32_16 = arith.constant 2 : i32
    %35 = arith.muli %c0_i32, %c2_i32_16 : i32
    %36 = arith.index_cast %35 : i32 to index
    %c0_17 = arith.constant 0 : index
    %37 = vector.load %arg10[%36, %c0_17] : memref<16x32xf32, #tpu.memory_space<vmem>>, vector<2x32xf32>
    tpu.vector_store %arg10[%36, %c0_17], %34 {strides = array<i32>} : memref<16x32xf32, #tpu.memory_space<vmem>>, vector<2x32xf32>,
    %c1_i32 = arith.constant 1 : i32
    %c2_i32_18 = arith.constant 2 : i32
    %38 = arith.muli %c1_i32, %c2_i32_18 : i32
    %39 = arith.index_cast %38 : i32 to index
    %c0_19 = arith.constant 0 : index
    %40 = vector.load %arg9[%39, %c0_19] : memref<16x96xf32, #tpu.memory_space<vmem>>, vector<2x96xf32>
    %cst_20 = arith.constant dense<0.000000e+00> : vector<2x96xf32>
    %41 = tpu.matmul %34, %7, %cst_20 {dimension_numbers = #tpu.dot_dimension_numbers<[1], [0], [0], [1], [0, 0, 1, 1], [], []>} : vector<2x32xf32>, vector<32x96xf32>, vector<2x96xf32> -> vector<2x96xf32>
    %42 = arith.addf %41, %10 : vector<2x96xf32>
    %43 = arith.addf %40, %42 : vector<2x96xf32>
    %44 = arith.negf %43 : vector<2x96xf32>
    %45 = math.exp %44 : vector<2x96xf32>
    %cst_21 = arith.constant 1.000000e+00 : f32
    %46 = vector.broadcast %cst_21 : f32 to vector<2x96xf32>
    %47 = arith.addf %46, %45 : vector<2x96xf32>
    %48 = arith.divf %46, %47 : vector<2x96xf32>
    %49 = vector.extract_strided_slice %48 {offsets = [0, 0], sizes = [2, 32], strides = [1, 1]} : vector<2x96xf32> to vector<2x32xf32>
    %50 = vector.extract_strided_slice %48 {offsets = [0, 32], sizes = [2, 32], strides = [1, 1]} : vector<2x96xf32> to vector<2x32xf32>
    %51 = vector.extract_strided_slice %40 {offsets = [0, 64], sizes = [2, 32], strides = [1, 1]} : vector<2x96xf32> to vector<2x32xf32>
    %52 = vector.extract_strided_slice %42 {offsets = [0, 64], sizes = [2, 32], strides = [1, 1]} : vector<2x96xf32> to vector<2x32xf32>
    %53 = arith.mulf %49, %52 : vector<2x32xf32>
    %54 = arith.addf %51, %53 : vector<2x32xf32>
    %55 = math.tanh %54 : vector<2x32xf32>
    %cst_22 = arith.constant 1.000000e+00 : f32
    %56 = vector.broadcast %cst_22 : f32 to vector<2x32xf32>
    %57 = arith.subf %56, %50 : vector<2x32xf32>
    %58 = arith.mulf %57, %55 : vector<2x32xf32>
    %59 = arith.mulf %50, %34 : vector<2x32xf32>
    %60 = arith.addf %58, %59 : vector<2x32xf32>
    %c2_i32_23 = arith.constant 2 : i32
    %61 = arith.muli %c1_i32, %c2_i32_23 : i32
    %62 = arith.index_cast %61 : i32 to index
    %c0_24 = arith.constant 0 : index
    %63 = vector.load %arg10[%62, %c0_24] : memref<16x32xf32, #tpu.memory_space<vmem>>, vector<2x32xf32>
    tpu.vector_store %arg10[%62, %c0_24], %60 {strides = array<i32>} : memref<16x32xf32, #tpu.memory_space<vmem>>, vector<2x32xf32>,
    %c2_i32_25 = arith.constant 2 : i32
    %c2_i32_26 = arith.constant 2 : i32
    %64 = arith.muli %c2_i32_25, %c2_i32_26 : i32
    %65 = arith.index_cast %64 : i32 to index
    %c0_27 = arith.constant 0 : index
    %66 = vector.load %arg9[%65, %c0_27] : memref<16x96xf32, #tpu.memory_space<vmem>>, vector<2x96xf32>
    %cst_28 = arith.constant dense<0.000000e+00> : vector<2x96xf32>
    %67 = tpu.matmul %60, %7, %cst_28 {dimension_numbers = #tpu.dot_dimension_numbers<[1], [0], [0], [1], [0, 0, 1, 1], [], []>} : vector<2x32xf32>, vector<32x96xf32>, vector<2x96xf32> -> vector<2x96xf32>
    %68 = arith.addf %67, %10 : vector<2x96xf32>
    %69 = arith.addf %66, %68 : vector<2x96xf32>
    %70 = arith.negf %69 : vector<2x96xf32>
    %71 = math.exp %70 : vector<2x96xf32>
    %cst_29 = arith.constant 1.000000e+00 : f32
    %72 = vector.broadcast %cst_29 : f32 to vector<2x96xf32>
    %73 = arith.addf %72, %71 : vector<2x96xf32>
    %74 = arith.divf %72, %73 : vector<2x96xf32>
    %75 = vector.extract_strided_slice %74 {offsets = [0, 0], sizes = [2, 32], strides = [1, 1]} : vector<2x96xf32> to vector<2x32xf32>
    %76 = vector.extract_strided_slice %74 {offsets = [0, 32], sizes = [2, 32], strides = [1, 1]} : vector<2x96xf32> to vector<2x32xf32>
    %77 = vector.extract_strided_slice %66 {offsets = [0, 64], sizes = [2, 32], strides = [1, 1]} : vector<2x96xf32> to vector<2x32xf32>
    %78 = vector.extract_strided_slice %68 {offsets = [0, 64], sizes = [2, 32], strides = [1, 1]} : vector<2x96xf32> to vector<2x32xf32>
    %79 = arith.mulf %75, %78 : vector<2x32xf32>
    %80 = arith.addf %77, %79 : vector<2x32xf32>
    %81 = math.tanh %80 : vector<2x32xf32>
    %cst_30 = arith.constant 1.000000e+00 : f32
    %82 = vector.broadcast %cst_30 : f32 to vector<2x32xf32>
    %83 = arith.subf %82, %76 : vector<2x32xf32>
    %84 = arith.mulf %83, %81 : vector<2x32xf32>
    %85 = arith.mulf %76, %60 : vector<2x32xf32>
    %86 = arith.addf %84, %85 : vector<2x32xf32>
    %c2_i32_31 = arith.constant 2 : i32
    %87 = arith.muli %c2_i32_25, %c2_i32_31 : i32
    %88 = arith.index_cast %87 : i32 to index
    %c0_32 = arith.constant 0 : index
    %89 = vector.load %arg10[%88, %c0_32] : memref<16x32xf32, #tpu.memory_space<vmem>>, vector<2x32xf32>
    tpu.vector_store %arg10[%88, %c0_32], %86 {strides = array<i32>} : memref<16x32xf32, #tpu.memory_space<vmem>>, vector<2x32xf32>,
    %c3_i32 = arith.constant 3 : i32
    %c2_i32_33 = arith.constant 2 : i32
    %90 = arith.muli %c3_i32, %c2_i32_33 : i32
    %91 = arith.index_cast %90 : i32 to index
    %c0_34 = arith.constant 0 : index
    %92 = vector.load %arg9[%91, %c0_34] : memref<16x96xf32, #tpu.memory_space<vmem>>, vector<2x96xf32>
    %cst_35 = arith.constant dense<0.000000e+00> : vector<2x96xf32>
    %93 = tpu.matmul %86, %7, %cst_35 {dimension_numbers = #tpu.dot_dimension_numbers<[1], [0], [0], [1], [0, 0, 1, 1], [], []>} : vector<2x32xf32>, vector<32x96xf32>, vector<2x96xf32> -> vector<2x96xf32>
    %94 = arith.addf %93, %10 : vector<2x96xf32>
    %95 = arith.addf %92, %94 : vector<2x96xf32>
    %96 = arith.negf %95 : vector<2x96xf32>
    %97 = math.exp %96 : vector<2x96xf32>
    %cst_36 = arith.constant 1.000000e+00 : f32
    %98 = vector.broadcast %cst_36 : f32 to vector<2x96xf32>
    %99 = arith.addf %98, %97 : vector<2x96xf32>
    %100 = arith.divf %98, %99 : vector<2x96xf32>
    %101 = vector.extract_strided_slice %100 {offsets = [0, 0], sizes = [2, 32], strides = [1, 1]} : vector<2x96xf32> to vector<2x32xf32>
    %102 = vector.extract_strided_slice %100 {offsets = [0, 32], sizes = [2, 32], strides = [1, 1]} : vector<2x96xf32> to vector<2x32xf32>
    %103 = vector.extract_strided_slice %92 {offsets = [0, 64], sizes = [2, 32], strides = [1, 1]} : vector<2x96xf32> to vector<2x32xf32>
    %104 = vector.extract_strided_slice %94 {offsets = [0, 64], sizes = [2, 32], strides = [1, 1]} : vector<2x96xf32> to vector<2x32xf32>
    %105 = arith.mulf %101, %104 : vector<2x32xf32>
    %106 = arith.addf %103, %105 : vector<2x32xf32>
    %107 = math.tanh %106 : vector<2x32xf32>
    %cst_37 = arith.constant 1.000000e+00 : f32
    %108 = vector.broadcast %cst_37 : f32 to vector<2x32xf32>
    %109 = arith.subf %108, %102 : vector<2x32xf32>
    %110 = arith.mulf %109, %107 : vector<2x32xf32>
    %111 = arith.mulf %102, %86 : vector<2x32xf32>
    %112 = arith.addf %110, %111 : vector<2x32xf32>
    %c2_i32_38 = arith.constant 2 : i32
    %113 = arith.muli %c3_i32, %c2_i32_38 : i32
    %114 = arith.index_cast %113 : i32 to index
    %c0_39 = arith.constant 0 : index
    %115 = vector.load %arg10[%114, %c0_39] : memref<16x32xf32, #tpu.memory_space<vmem>>, vector<2x32xf32>
    tpu.vector_store %arg10[%114, %c0_39], %112 {strides = array<i32>} : memref<16x32xf32, #tpu.memory_space<vmem>>, vector<2x32xf32>,
    %c4_i32 = arith.constant 4 : i32
    %c2_i32_40 = arith.constant 2 : i32
    %116 = arith.muli %c4_i32, %c2_i32_40 : i32
    %117 = arith.index_cast %116 : i32 to index
    %c0_41 = arith.constant 0 : index
    %118 = vector.load %arg9[%117, %c0_41] : memref<16x96xf32, #tpu.memory_space<vmem>>, vector<2x96xf32>
    %cst_42 = arith.constant dense<0.000000e+00> : vector<2x96xf32>
    %119 = tpu.matmul %112, %7, %cst_42 {dimension_numbers = #tpu.dot_dimension_numbers<[1], [0], [0], [1], [0, 0, 1, 1], [], []>} : vector<2x32xf32>, vector<32x96xf32>, vector<2x96xf32> -> vector<2x96xf32>
    %120 = arith.addf %119, %10 : vector<2x96xf32>
    %121 = arith.addf %118, %120 : vector<2x96xf32>
    %122 = arith.negf %121 : vector<2x96xf32>
    %123 = math.exp %122 : vector<2x96xf32>
    %cst_43 = arith.constant 1.000000e+00 : f32
    %124 = vector.broadcast %cst_43 : f32 to vector<2x96xf32>
    %125 = arith.addf %124, %123 : vector<2x96xf32>
    %126 = arith.divf %124, %125 : vector<2x96xf32>
    %127 = vector.extract_strided_slice %126 {offsets = [0, 0], sizes = [2, 32], strides = [1, 1]} : vector<2x96xf32> to vector<2x32xf32>
    %128 = vector.extract_strided_slice %126 {offsets = [0, 32], sizes = [2, 32], strides = [1, 1]} : vector<2x96xf32> to vector<2x32xf32>
    %129 = vector.extract_strided_slice %118 {offsets = [0, 64], sizes = [2, 32], strides = [1, 1]} : vector<2x96xf32> to vector<2x32xf32>
    %130 = vector.extract_strided_slice %120 {offsets = [0, 64], sizes = [2, 32], strides = [1, 1]} : vector<2x96xf32> to vector<2x32xf32>
    %131 = arith.mulf %127, %130 : vector<2x32xf32>
    %132 = arith.addf %129, %131 : vector<2x32xf32>
    %133 = math.tanh %132 : vector<2x32xf32>
    %cst_44 = arith.constant 1.000000e+00 : f32
    %134 = vector.broadcast %cst_44 : f32 to vector<2x32xf32>
    %135 = arith.subf %134, %128 : vector<2x32xf32>
    %136 = arith.mulf %135, %133 : vector<2x32xf32>
    %137 = arith.mulf %128, %112 : vector<2x32xf32>
    %138 = arith.addf %136, %137 : vector<2x32xf32>
    %c2_i32_45 = arith.constant 2 : i32
    %139 = arith.muli %c4_i32, %c2_i32_45 : i32
    %140 = arith.index_cast %139 : i32 to index
    %c0_46 = arith.constant 0 : index
    %141 = vector.load %arg10[%140, %c0_46] : memref<16x32xf32, #tpu.memory_space<vmem>>, vector<2x32xf32>
    tpu.vector_store %arg10[%140, %c0_46], %138 {strides = array<i32>} : memref<16x32xf32, #tpu.memory_space<vmem>>, vector<2x32xf32>,
    %c5_i32 = arith.constant 5 : i32
    %c2_i32_47 = arith.constant 2 : i32
    %142 = arith.muli %c5_i32, %c2_i32_47 : i32
    %143 = arith.index_cast %142 : i32 to index
    %c0_48 = arith.constant 0 : index
    %144 = vector.load %arg9[%143, %c0_48] : memref<16x96xf32, #tpu.memory_space<vmem>>, vector<2x96xf32>
    %cst_49 = arith.constant dense<0.000000e+00> : vector<2x96xf32>
    %145 = tpu.matmul %138, %7, %cst_49 {dimension_numbers = #tpu.dot_dimension_numbers<[1], [0], [0], [1], [0, 0, 1, 1], [], []>} : vector<2x32xf32>, vector<32x96xf32>, vector<2x96xf32> -> vector<2x96xf32>
    %146 = arith.addf %145, %10 : vector<2x96xf32>
    %147 = arith.addf %144, %146 : vector<2x96xf32>
    %148 = arith.negf %147 : vector<2x96xf32>
    %149 = math.exp %148 : vector<2x96xf32>
    %cst_50 = arith.constant 1.000000e+00 : f32
    %150 = vector.broadcast %cst_50 : f32 to vector<2x96xf32>
    %151 = arith.addf %150, %149 : vector<2x96xf32>
    %152 = arith.divf %150, %151 : vector<2x96xf32>
    %153 = vector.extract_strided_slice %152 {offsets = [0, 0], sizes = [2, 32], strides = [1, 1]} : vector<2x96xf32> to vector<2x32xf32>
    %154 = vector.extract_strided_slice %152 {offsets = [0, 32], sizes = [2, 32], strides = [1, 1]} : vector<2x96xf32> to vector<2x32xf32>
    %155 = vector.extract_strided_slice %144 {offsets = [0, 64], sizes = [2, 32], strides = [1, 1]} : vector<2x96xf32> to vector<2x32xf32>
    %156 = vector.extract_strided_slice %146 {offsets = [0, 64], sizes = [2, 32], strides = [1, 1]} : vector<2x96xf32> to vector<2x32xf32>
    %157 = arith.mulf %153, %156 : vector<2x32xf32>
    %158 = arith.addf %155, %157 : vector<2x32xf32>
    %159 = math.tanh %158 : vector<2x32xf32>
    %cst_51 = arith.constant 1.000000e+00 : f32
    %160 = vector.broadcast %cst_51 : f32 to vector<2x32xf32>
    %161 = arith.subf %160, %154 : vector<2x32xf32>
    %162 = arith.mulf %161, %159 : vector<2x32xf32>
    %163 = arith.mulf %154, %138 : vector<2x32xf32>
    %164 = arith.addf %162, %163 : vector<2x32xf32>
    %c2_i32_52 = arith.constant 2 : i32
    %165 = arith.muli %c5_i32, %c2_i32_52 : i32
    %166 = arith.index_cast %165 : i32 to index
    %c0_53 = arith.constant 0 : index
    %167 = vector.load %arg10[%166, %c0_53] : memref<16x32xf32, #tpu.memory_space<vmem>>, vector<2x32xf32>
    tpu.vector_store %arg10[%166, %c0_53], %164 {strides = array<i32>} : memref<16x32xf32, #tpu.memory_space<vmem>>, vector<2x32xf32>,
    %c6_i32 = arith.constant 6 : i32
    %c2_i32_54 = arith.constant 2 : i32
    %168 = arith.muli %c6_i32, %c2_i32_54 : i32
    %169 = arith.index_cast %168 : i32 to index
    %c0_55 = arith.constant 0 : index
    %170 = vector.load %arg9[%169, %c0_55] : memref<16x96xf32, #tpu.memory_space<vmem>>, vector<2x96xf32>
    %cst_56 = arith.constant dense<0.000000e+00> : vector<2x96xf32>
    %171 = tpu.matmul %164, %7, %cst_56 {dimension_numbers = #tpu.dot_dimension_numbers<[1], [0], [0], [1], [0, 0, 1, 1], [], []>} : vector<2x32xf32>, vector<32x96xf32>, vector<2x96xf32> -> vector<2x96xf32>
    %172 = arith.addf %171, %10 : vector<2x96xf32>
    %173 = arith.addf %170, %172 : vector<2x96xf32>
    %174 = arith.negf %173 : vector<2x96xf32>
    %175 = math.exp %174 : vector<2x96xf32>
    %cst_57 = arith.constant 1.000000e+00 : f32
    %176 = vector.broadcast %cst_57 : f32 to vector<2x96xf32>
    %177 = arith.addf %176, %175 : vector<2x96xf32>
    %178 = arith.divf %176, %177 : vector<2x96xf32>
    %179 = vector.extract_strided_slice %178 {offsets = [0, 0], sizes = [2, 32], strides = [1, 1]} : vector<2x96xf32> to vector<2x32xf32>
    %180 = vector.extract_strided_slice %178 {offsets = [0, 32], sizes = [2, 32], strides = [1, 1]} : vector<2x96xf32> to vector<2x32xf32>
    %181 = vector.extract_strided_slice %170 {offsets = [0, 64], sizes = [2, 32], strides = [1, 1]} : vector<2x96xf32> to vector<2x32xf32>
    %182 = vector.extract_strided_slice %172 {offsets = [0, 64], sizes = [2, 32], strides = [1, 1]} : vector<2x96xf32> to vector<2x32xf32>
    %183 = arith.mulf %179, %182 : vector<2x32xf32>
    %184 = arith.addf %181, %183 : vector<2x32xf32>
    %185 = math.tanh %184 : vector<2x32xf32>
    %cst_58 = arith.constant 1.000000e+00 : f32
    %186 = vector.broadcast %cst_58 : f32 to vector<2x32xf32>
    %187 = arith.subf %186, %180 : vector<2x32xf32>
    %188 = arith.mulf %187, %185 : vector<2x32xf32>
    %189 = arith.mulf %180, %164 : vector<2x32xf32>
    %190 = arith.addf %188, %189 : vector<2x32xf32>
    %c2_i32_59 = arith.constant 2 : i32
    %191 = arith.muli %c6_i32, %c2_i32_59 : i32
    %192 = arith.index_cast %191 : i32 to index
    %c0_60 = arith.constant 0 : index
    %193 = vector.load %arg10[%192, %c0_60] : memref<16x32xf32, #tpu.memory_space<vmem>>, vector<2x32xf32>
    tpu.vector_store %arg10[%192, %c0_60], %190 {strides = array<i32>} : memref<16x32xf32, #tpu.memory_space<vmem>>, vector<2x32xf32>,
    %c7_i32 = arith.constant 7 : i32
    %c2_i32_61 = arith.constant 2 : i32
    %194 = arith.muli %c7_i32, %c2_i32_61 : i32
    %195 = arith.index_cast %194 : i32 to index
    %c0_62 = arith.constant 0 : index
    %196 = vector.load %arg9[%195, %c0_62] : memref<16x96xf32, #tpu.memory_space<vmem>>, vector<2x96xf32>
    %cst_63 = arith.constant dense<0.000000e+00> : vector<2x96xf32>
    %197 = tpu.matmul %190, %7, %cst_63 {dimension_numbers = #tpu.dot_dimension_numbers<[1], [0], [0], [1], [0, 0, 1, 1], [], []>} : vector<2x32xf32>, vector<32x96xf32>, vector<2x96xf32> -> vector<2x96xf32>
    %198 = arith.addf %197, %10 : vector<2x96xf32>
    %199 = arith.addf %196, %198 : vector<2x96xf32>
    %200 = arith.negf %199 : vector<2x96xf32>
    %201 = math.exp %200 : vector<2x96xf32>
    %cst_64 = arith.constant 1.000000e+00 : f32
    %202 = vector.broadcast %cst_64 : f32 to vector<2x96xf32>
    %203 = arith.addf %202, %201 : vector<2x96xf32>
    %204 = arith.divf %202, %203 : vector<2x96xf32>
    %205 = vector.extract_strided_slice %204 {offsets = [0, 0], sizes = [2, 32], strides = [1, 1]} : vector<2x96xf32> to vector<2x32xf32>
    %206 = vector.extract_strided_slice %204 {offsets = [0, 32], sizes = [2, 32], strides = [1, 1]} : vector<2x96xf32> to vector<2x32xf32>
    %207 = vector.extract_strided_slice %196 {offsets = [0, 64], sizes = [2, 32], strides = [1, 1]} : vector<2x96xf32> to vector<2x32xf32>
    %208 = vector.extract_strided_slice %198 {offsets = [0, 64], sizes = [2, 32], strides = [1, 1]} : vector<2x96xf32> to vector<2x32xf32>
    %209 = arith.mulf %205, %208 : vector<2x32xf32>
    %210 = arith.addf %207, %209 : vector<2x32xf32>
    %211 = math.tanh %210 : vector<2x32xf32>
    %cst_65 = arith.constant 1.000000e+00 : f32
    %212 = vector.broadcast %cst_65 : f32 to vector<2x32xf32>
    %213 = arith.subf %212, %206 : vector<2x32xf32>
    %214 = arith.mulf %213, %211 : vector<2x32xf32>
    %215 = arith.mulf %206, %190 : vector<2x32xf32>
    %216 = arith.addf %214, %215 : vector<2x32xf32>
    %c2_i32_66 = arith.constant 2 : i32
    %217 = arith.muli %c7_i32, %c2_i32_66 : i32
    %218 = arith.index_cast %217 : i32 to index
    %c0_67 = arith.constant 0 : index
    %219 = vector.load %arg10[%218, %c0_67] : memref<16x32xf32, #tpu.memory_space<vmem>>, vector<2x32xf32>
    tpu.vector_store %arg10[%218, %c0_67], %216 {strides = array<i32>} : memref<16x32xf32, #tpu.memory_space<vmem>>, vector<2x32xf32>,
    %c8_i32 = arith.constant 8 : i32
    %c0_68 = arith.constant 0 : index
    %c0_69 = arith.constant 0 : index
    %220 = vector.load %arg10[%c0_68, %c0_69] : memref<16x32xf32, #tpu.memory_space<vmem>>, vector<16x32xf32>
    %c0_70 = arith.constant 0 : index
    %c0_71 = arith.constant 0 : index
    %221 = vector.load %arg6[%c0_70, %c0_71] : memref<32x4xf32, #tpu.memory_space<vmem>>, vector<32x4xf32>
    %cst_72 = arith.constant dense<0.000000e+00> : vector<16x4xf32>
    %222 = tpu.matmul %220, %221, %cst_72 {dimension_numbers = #tpu.dot_dimension_numbers<[1], [0], [0], [1], [0, 0, 1, 1], [], []>} : vector<16x32xf32>, vector<32x4xf32>, vector<16x4xf32> -> vector<16x4xf32>
    %c0_73 = arith.constant 0 : index
    %c0_74 = arith.constant 0 : index
    %223 = vector.load %arg7[%c0_73, %c0_74] : memref<1x4xf32, #tpu.memory_space<vmem>>, vector<1x4xf32>
    %224 = vector.broadcast %223 : vector<1x4xf32> to vector<16x4xf32>
    %225 = arith.addf %222, %224 : vector<16x4xf32>
    %c0_75 = arith.constant 0 : index
    %c0_76 = arith.constant 0 : index
    %226 = vector.load %arg8[%c0_75, %c0_76] : memref<16x4xf32, #tpu.memory_space<vmem>>, vector<16x4xf32>
    tpu.vector_store %arg8[%c0_75, %c0_76], %225 {strides = array<i32>} : memref<16x4xf32, #tpu.memory_space<vmem>>, vector<16x4xf32>,
    return
  }
  func.func @transform_0(%arg0: i32) -> (i32, i32) {
    %c0_i32 = arith.constant 0 : i32
    %c0_i32_0 = arith.constant 0 : i32
    %c0_i32_1 = arith.constant 0 : i32
    return %c0_i32, %c0_i32_0 : i32, i32
  }
  func.func @transform_1(%arg0: i32) -> (i32, i32) {
    %c0_i32 = arith.constant 0 : i32
    %c0_i32_0 = arith.constant 0 : i32
    %c0_i32_1 = arith.constant 0 : i32
    return %c0_i32, %c0_i32_0 : i32, i32
  }
  func.func @transform_2(%arg0: i32) -> (i32, i32) {
    %c0_i32 = arith.constant 0 : i32
    %c0_i32_0 = arith.constant 0 : i32
    %c0_i32_1 = arith.constant 0 : i32
    return %c0_i32, %c0_i32_0 : i32, i32
  }
  func.func @transform_3(%arg0: i32) -> (i32, i32) {
    %c0_i32 = arith.constant 0 : i32
    %c0_i32_0 = arith.constant 0 : i32
    %c0_i32_1 = arith.constant 0 : i32
    return %c0_i32, %c0_i32_0 : i32, i32
  }
  func.func @transform_4(%arg0: i32) -> (i32, i32) {
    %c0_i32 = arith.constant 0 : i32
    %c0_i32_0 = arith.constant 0 : i32
    %c0_i32_1 = arith.constant 0 : i32
    return %c0_i32, %c0_i32_0 : i32, i32
  }
  func.func @transform_5(%arg0: i32) -> (i32, i32) {
    %c0_i32 = arith.constant 0 : i32
    %c0_i32_0 = arith.constant 0 : i32
    %c0_i32_1 = arith.constant 0 : i32
    return %c0_i32, %c0_i32_0 : i32, i32
  }
  func.func @transform_6(%arg0: i32) -> (i32, i32) {
    %c0_i32 = arith.constant 0 : i32
    %c0_i32_0 = arith.constant 0 : i32
    %c0_i32_1 = arith.constant 0 : i32
    return %c0_i32, %c0_i32_0 : i32, i32
  }
  func.func @transform_7(%arg0: i32) -> (i32, i32) {
    %c0_i32 = arith.constant 0 : i32
    %c0_i32_0 = arith.constant 0 : i32
    %c0_i32_1 = arith.constant 0 : i32
    return %c0_i32, %c0_i32_0 : i32, i32
  }
}

</mosaic_0001>

<llo_original>
// kernel: decoder_forward.1
$region0: #{decoder_forward.1}
  #allocation0 [shape = 'u32[]', space=smem, size = 0x4, offset = 0x4, fixed_abs, tag = 'smem constant byte address 0x4 - core index']
  #allocation1 [shape = 'u32[144,128]{1,0:T(1,128)}', space=vmem, size = 0x12000, scoped, tag = 'internal scratch']
  #allocation2 [shape = 'f32[16,96]{1,0:T(8,128)}', space=vmem, size = 0x2000, scoped, tag = 'scratch operand']
  #allocation3 [shape = 'f32[16,32]{1,0:T(8,128)}', space=vmem, size = 0x2000, scoped, tag = 'scratch operand']
  %s0 = inlined_call_operand.vmem [shape: f32[16,4], index: 0, kind: input, shape index: {}]
  %s1 = inlined_call_operand.vmem [shape: f32[4,96], index: 1, kind: input, shape index: {}]
  %s2 = inlined_call_operand.vmem [shape: f32[32,96], index: 2, kind: input, shape index: {}]
  %s3 = inlined_call_operand.vmem [shape: f32[1,96], index: 3, kind: input, shape index: {}]
  %s4 = inlined_call_operand.vmem [shape: f32[1,96], index: 4, kind: input, shape index: {}]
  %s5 = inlined_call_operand.vmem [shape: f32[32,4], index: 5, kind: input, shape index: {}]
  %s6 = inlined_call_operand.vmem [shape: f32[1,4], index: 6, kind: input, shape index: {}]
  %s7 = inlined_call_operand.vmem [shape: f32[16,4], index: 7, kind: output, shape index: {}]
  %s8 = sld [smem:[#allocation0]]
  $region38: #{decoder_forward.1} parent=0
    _
  %s10 = ssub.s32 1, %s8
  %s11 = scalar_select 0, %s10, %s8
  // Predicated region
  $region2: #{decoder_forward.1} parent=0 // pred_check
    _
  $region3: #{decoder_forward.1} parent=0 // pred_check_branch
    %13 = sbr.rel (0) target = $region5
  $region4: #{decoder_forward.1} parent=0 // pred_region
    _
  $region5: #{decoder_forward.1} parent=0 // pred_fallthru
    _
  // Predicated region
  $region6: #{decoder_forward.1} parent=0 // pred_check
    _
  $region7: #{decoder_forward.1} parent=0 // pred_check_branch
    %15 = sbr.rel (0) target = $region9
  $region8: #{decoder_forward.1} parent=0 // pred_region
    _
  $region9: #{decoder_forward.1} parent=0 // pred_fallthru
    _
  // Predicated region
  $region10: #{decoder_forward.1} parent=0 // pred_check
    _
  $region11: #{decoder_forward.1} parent=0 // pred_check_branch
    %17 = sbr.rel (0) target = $region13
  $region12: #{decoder_forward.1} parent=0 // pred_region
    _
  $region13: #{decoder_forward.1} parent=0 // pred_fallthru
    _
  // Predicated region
  $region14: #{decoder_forward.1} parent=0 // pred_check
    _
  $region15: #{decoder_forward.1} parent=0 // pred_check_branch
    %19 = sbr.rel (0) target = $region17
  $region16: #{decoder_forward.1} parent=0 // pred_region
    _
  $region17: #{decoder_forward.1} parent=0 // pred_fallthru
    _
  // Predicated region
  $region18: #{decoder_forward.1} parent=0 // pred_check
    _
  $region19: #{decoder_forward.1} parent=0 // pred_check_branch
    %21 = sbr.rel (0) target = $region21
  $region20: #{decoder_forward.1} parent=0 // pred_region
    _
  $region21: #{decoder_forward.1} parent=0 // pred_fallthru
    _
  // Predicated region
  $region22: #{decoder_forward.1} parent=0 // pred_check
    _
  $region23: #{decoder_forward.1} parent=0 // pred_check_branch
    %23 = sbr.rel (0) target = $region25
  $region24: #{decoder_forward.1} parent=0 // pred_region
    _
  $region25: #{decoder_forward.1} parent=0 // pred_fallthru
    _
  // Predicated region
  $region26: #{decoder_forward.1} parent=0 // pred_check
    _
  $region27: #{decoder_forward.1} parent=0 // pred_check_branch
    %25 = sbr.rel (0) target = $region29
  $region28: #{decoder_forward.1} parent=0 // pred_region
    _
  $region29: #{decoder_forward.1} parent=0 // pred_fallthru
    _
  %v26 = vld [vmem:[%s0] sm:$0xff]
  %v27 = vld [vmem:[%s0 + $0x8] sm:$0xff]
  %v28 = vld [vmem:[%s1] sm:$0xf]
  %v29 = vld [vmem:[%s3] sm:$0x1]
  %v31 = vlaneseq
  %v32 = vshrl.u32 %v31, 7
  %v33 = vsub.s32 0, %v32
  %v34 = vrot.slane %v29, %v33
  %vm36 = vcmask 31744
  %v38 = vsel %vm36, %v26, 0
  %v41 = vsel %vm36, %v27, 0
  %vm43 = vcmask 1043456
  %v45 = vsel %vm43, %v28, 0
  %47 = vmatprep.subr.mxu0 0.0
  %48 = vmatpush1.msra.mxu0 0.0
  %49 = vmatprep.subr.mxu0 0.0
  %50 = vmatpush1.msra.mxu0 0.0
  %51 = vmatprep.subr.mxu0 0.0
  %52 = vmatpush1.msra.mxu0 0.0
  %53 = vmatprep.subr.mxu0 0.0
  %54 = vmatpush1.msra.mxu0 0.0
  %55 = vmatprep.subr.mxu0 0.0
  %56 = vmatpush1.msra.mxu0 0.0
  %57 = vmatprep.subr.mxu0 0.0
  %58 = vmatpush1.msra.mxu0 0.0
  %59 = vmatprep.subr.mxu0 0.0
  %60 = vmatpush1.msra.mxu0 0.0
  %61 = vmatprep.subr.mxu0 0.0
  %62 = vmatpush1.msra.mxu0 0.0
  %63 = vmatprep.subr.mxu0 0.0
  %64 = vmatpush1.msra.mxu0 0.0
  %65 = vmatprep.subr.mxu0 0.0
  %66 = vmatpush1.msra.mxu0 0.0
  %67 = vmatprep.subr.mxu0 0.0
  %68 = vmatpush1.msra.mxu0 0.0
  %69 = vmatprep.subr.mxu0 0.0
  %70 = vmatpush1.msra.mxu0 0.0
  %71 = vmatprep.subr.mxu0 0.0
  %72 = vmatpush1.msra.mxu0 0.0
  %73 = vmatprep.subr.mxu0 0.0
  %74 = vmatpush1.msra.mxu0 0.0
  %75 = vmatprep.subr.mxu0 0.0
  %76 = vmatpush1.msra.mxu0 0.0
  %77 = vmatprep.subr.mxu0 0.0
  %78 = vmatpush1.msra.mxu0 %v45
  %79 = vmatprep.subr.mxu0 0.0
  %80 = vmatpush2.msra.mxu0 0.0
  %81 = vmatprep.subr.mxu0 0.0
  %82 = vmatpush2.msra.mxu0 0.0
  %83 = vmatprep.subr.mxu0 0.0
  %84 = vmatpush2.msra.mxu0 0.0
  %85 = vmatprep.subr.mxu0 0.0
  %86 = vmatpush2.msra.mxu0 0.0
  %87 = vmatprep.subr.mxu0 0.0
  %88 = vmatpush2.msra.mxu0 0.0
  %89 = vmatprep.subr.mxu0 0.0
  %90 = vmatpush2.msra.mxu0 0.0
  %91 = vmatprep.subr.mxu0 0.0
  %92 = vmatpush2.msra.mxu0 0.0
  %93 = vmatprep.subr.mxu0 0.0
  %94 = vmatpush2.msra.mxu0 0.0
  %95 = vmatprep.subr.mxu0 0.0
  %96 = vmatpush2.msra.mxu0 0.0
  %97 = vmatprep.subr.mxu0 0.0
  %98 = vmatpush2.msra.mxu0 0.0
  %99 = vmatprep.subr.mxu0 0.0
  %100 = vmatpush2.msra.mxu0 0.0
  %101 = vmatprep.subr.mxu0 0.0
  %102 = vmatpush2.msra.mxu0 0.0
  %103 = vmatprep.subr.mxu0 0.0
  %104 = vmatpush2.msra.mxu0 0.0
  %105 = vmatprep.subr.mxu0 0.0
  %106 = vmatpush2.msra.mxu0 0.0
  %107 = vmatprep.subr.mxu0 0.0
  %108 = vmatpush2.msra.mxu0 0.0
  %109 = vmatprep.subr.mxu0 0.0
  %110 = vmatpush2.msra.mxu0 0.0
  %111 = vmatprep.mubr.f32.mxu0 0.0
  %112 = vmatmul.mubr.f32.gmra.mxu0 %v38
  %v113 = vpop.f32.mrf.mxu0
  %v114 = vadd.f32 %v34, %v113
  %v115 = vpop.f32.mrf.mxu0
  %116 = vmatprep.mubr.f32.mxu0 0.0
  %117 = vmatmul.mubr.f32.gmra.mxu0 %v41
  %v118 = vpop.f32.mrf.mxu0
  %v119 = vadd.f32 %v34, %v118
  %v120 = vpop.f32.mrf.mxu0
  %121 = vdwg.mxu0
  %vm122 = vcmask 785408
  %123 = vst.msk [vmem:[#allocation2] sm:$0xff] %vm122, %v114
  %124 = vst.msk [vmem:[#allocation2 + $0x8] sm:$0xff] %vm122, %v119
  %v125 = vld [vmem:[%s2] sm:$0xff]
  %v126 = vld [vmem:[%s2 + $0x8] sm:$0xff]
  %v127 = vld [vmem:[%s2 + $0x10] sm:$0xff]
  %v128 = vld [vmem:[%s2 + $0x18] sm:$0xff]
  %v129 = vld [vmem:[%s4] sm:$0x1]
  %v131 = vlaneseq
  %v132 = vshrl.u32 %v131, 7
  %v133 = vsub.s32 0, %v132
  %v134 = vrot.slane %v129, %v133
  %v136 = vld [vmem:[#allocation2] sm:$0x3]
  %vm137 = vcmask 261120
  %v139 = vsel %vm137, 0.0, 0
  %141 = vmatprep.subr.mxu0 0.0
  %142 = vmatpush1.msra.mxu0 0.0
  %143 = vmatprep.subr.mxu0 0.0
  %144 = vmatpush1.msra.mxu0 0.0
  %145 = vmatprep.subr.mxu0 0.0
  %146 = vmatpush1.msra.mxu0 0.0
  %147 = vmatprep.subr.mxu0 0.0
  %148 = vmatpush1.msra.mxu0 0.0
  %149 = vmatprep.subr.mxu0 0.0
  %150 = vmatpush1.msra.mxu0 0.0
  %151 = vmatprep.subr.mxu0 0.0
  %152 = vmatpush1.msra.mxu0 0.0
  %153 = vmatprep.subr.mxu0 0.0
  %154 = vmatpush1.msra.mxu0 0.0
  %155 = vmatprep.subr.mxu0 0.0
  %156 = vmatpush1.msra.mxu0 0.0
  %157 = vmatprep.subr.mxu0 0.0
  %158 = vmatpush1.msra.mxu0 0.0
  %159 = vmatprep.subr.mxu0 0.0
  %160 = vmatpush1.msra.mxu0 0.0
  %161 = vmatprep.subr.mxu0 0.0
  %162 = vmatpush1.msra.mxu0 0.0
  %163 = vmatprep.subr.mxu0 0.0
  %164 = vmatpush1.msra.mxu0 0.0
  %165 = vmatprep.subr.mxu0 0.0
  %166 = vmatpush1.msra.mxu0 %v128
  %167 = vmatprep.subr.mxu0 0.0
  %168 = vmatpush1.msra.mxu0 %v127
  %169 = vmatprep.subr.mxu0 0.0
  %170 = vmatpush1.msra.mxu0 %v126
  %171 = vmatprep.subr.mxu0 0.0
  %172 = vmatpush1.msra.mxu0 %v125
  %173 = vmatprep.subr.mxu0 0.0
  %174 = vmatpush2.msra.mxu0 0.0
  %175 = vmatprep.subr.mxu0 0.0
  %176 = vmatpush2.msra.mxu0 0.0
  %177 = vmatprep.subr.mxu0 0.0
  %178 = vmatpush2.msra.mxu0 0.0
  %179 = vmatprep.subr.mxu0 0.0
  %180 = vmatpush2.msra.mxu0 0.0
  %181 = vmatprep.subr.mxu0 0.0
  %182 = vmatpush2.msra.mxu0 0.0
  %183 = vmatprep.subr.mxu0 0.0
  %184 = vmatpush2.msra.mxu0 0.0
  %185 = vmatprep.subr.mxu0 0.0
  %186 = vmatpush2.msra.mxu0 0.0
  %187 = vmatprep.subr.mxu0 0.0
  %188 = vmatpush2.msra.mxu0 0.0
  %189 = vmatprep.subr.mxu0 0.0
  %190 = vmatpush2.msra.mxu0 0.0
  %191 = vmatprep.subr.mxu0 0.0
  %192 = vmatpush2.msra.mxu0 0.0
  %193 = vmatprep.subr.mxu0 0.0
  %194 = vmatpush2.msra.mxu0 0.0
  %195 = vmatprep.subr.mxu0 0.0
  %196 = vmatpush2.msra.mxu0 0.0
  %197 = vmatprep.subr.mxu0 0.0
  %198 = vmatpush2.msra.mxu0 0.0
  %199 = vmatprep.subr.mxu0 0.0
  %200 = vmatpush2.msra.mxu0 0.0
  %201 = vmatprep.subr.mxu0 0.0
  %202 = vmatpush2.msra.mxu0 0.0
  %203 = vmatprep.subr.mxu0 0.0
  %204 = vmatpush2.msra.mxu0 0.0
  %205 = vmatprep.mubr.f32.mxu0 0.0
  %206 = vmatmul.mubr.f32.gmra.mxu0 %v139
  %v207 = vpop.f32.mrf.mxu0
  %v208 = vadd.f32 %v134, %v207
  %v209 = vpop.f32.mrf.mxu0
  %210 = vdwg.mxu0
  %v211 = vadd.f32 %v136, %v208
  %v212 = vxor.u32 %v211, 2147483648
  %v213 = vmul.f32 %v212, 1.442695
  %v214 = vpow.pop %v213
  %v215 = vadd.f32 %v214, 1.0
  %v216 = vrcp.pop %v215
  %v217 = vmul.f32 1.0, %v216
  %219 = vrot.lane.b32.xlu0 %v208, 64
  %v220 = vpop.permute.xlu0 %219
  %v222 = vmul.f32 %v217, %v220
  %224 = vrot.lane.b32.xlu0 %v222, 64
  %v225 = vpop.permute.xlu0 %224
  %v227 = vadd.f32 %v136, %v225
  %v228 = vtanh.pop %v227
  %v229 = vsub.f32 1.0, %v217
  %231 = vrot.lane.b32.xlu0 %v228, 96
  %v232 = vpop.permute.xlu0 %231
  %v234 = vmul.f32 %v229, %v232
  %v235 = vmul.f32 %v217, 0.0
  %v236 = vadd.f32 %v234, %v235
  %238 = vrot.lane.b32.xlu0 %v236, 96
  %v239 = vpop.permute.xlu0 %238
  %vm241 = vcmask 254976
  %242 = vst.msk [vmem:[#allocation3] sm:$0x3] %vm241, %v239
  %v243 = vld [vmem:[#allocation2 + $0x2] sm:$0x3]
  %v244 = vsel %vm137, %v239, 0
  %246 = vmatprep.subr.mxu0 0.0
  %247 = vmatpush1.msra.mxu0 0.0
  %248 = vmatprep.subr.mxu0 0.0
  %249 = vmatpush1.msra.mxu0 0.0
  %250 = vmatprep.subr.mxu0 0.0
  %251 = vmatpush1.msra.mxu0 0.0
  %252 = vmatprep.subr.mxu0 0.0
  %253 = vmatpush1.msra.mxu0 0.0
  %254 = vmatprep.subr.mxu0 0.0
  %255 = vmatpush1.msra.mxu0 0.0
  %256 = vmatprep.subr.mxu0 0.0
  %257 = vmatpush1.msra.mxu0 0.0
  %258 = vmatprep.subr.mxu0 0.0
  %259 = vmatpush1.msra.mxu0 0.0
  %260 = vmatprep.subr.mxu0 0.0
  %261 = vmatpush1.msra.mxu0 0.0
  %262 = vmatprep.subr.mxu0 0.0
  %263 = vmatpush1.msra.mxu0 0.0
  %264 = vmatprep.subr.mxu0 0.0
  %265 = vmatpush1.msra.mxu0 0.0
  %266 = vmatprep.subr.mxu0 0.0
  %267 = vmatpush1.msra.mxu0 0.0
  %268 = vmatprep.subr.mxu0 0.0
  %269 = vmatpush1.msra.mxu0 0.0
  %270 = vmatprep.subr.mxu0 0.0
  %271 = vmatpush1.msra.mxu0 %v128
  %272 = vmatprep.subr.mxu0 0.0
  %273 = vmatpush1.msra.mxu0 %v127
  %274 = vmatprep.subr.mxu0 0.0
  %275 = vmatpush1.msra.mxu0 %v126
  %276 = vmatprep.subr.mxu0 0.0
  %277 = vmatpush1.msra.mxu0 %v125
  %278 = vmatprep.subr.mxu0 0.0
  %279 = vmatpush2.msra.mxu0 0.0
  %280 = vmatprep.subr.mxu0 0.0
  %281 = vmatpush2.msra.mxu0 0.0
  %282 = vmatprep.subr.mxu0 0.0
  %283 = vmatpush2.msra.mxu0 0.0
  %284 = vmatprep.subr.mxu0 0.0
  %285 = vmatpush2.msra.mxu0 0.0
  %286 = vmatprep.subr.mxu0 0.0
  %287 = vmatpush2.msra.mxu0 0.0
  %288 = vmatprep.subr.mxu0 0.0
  %289 = vmatpush2.msra.mxu0 0.0
  %290 = vmatprep.subr.mxu0 0.0
  %291 = vmatpush2.msra.mxu0 0.0
  %292 = vmatprep.subr.mxu0 0.0
  %293 = vmatpush2.msra.mxu0 0.0
  %294 = vmatprep.subr.mxu0 0.0
  %295 = vmatpush2.msra.mxu0 0.0
  %296 = vmatprep.subr.mxu0 0.0
  %297 = vmatpush2.msra.mxu0 0.0
  %298 = vmatprep.subr.mxu0 0.0
  %299 = vmatpush2.msra.mxu0 0.0
  %300 = vmatprep.subr.mxu0 0.0
  %301 = vmatpush2.msra.mxu0 0.0
  %302 = vmatprep.subr.mxu0 0.0
  %303 = vmatpush2.msra.mxu0 0.0
  %304 = vmatprep.subr.mxu0 0.0
  %305 = vmatpush2.msra.mxu0 0.0
  %306 = vmatprep.subr.mxu0 0.0
  %307 = vmatpush2.msra.mxu0 0.0
  %308 = vmatprep.subr.mxu0 0.0
  %309 = vmatpush2.msra.mxu0 0.0
  %310 = vmatprep.mubr.f32.mxu0 0.0
  %311 = vmatmul.mubr.f32.gmra.mxu0 %v244
  %v312 = vpop.f32.mrf.mxu0
  %v313 = vadd.f32 %v134, %v312
  %v314 = vpop.f32.mrf.mxu0
  %315 = vdwg.mxu0
  %v316 = vadd.f32 %v243, %v313
  %v317 = vxor.u32 %v316, 2147483648
  %v318 = vmul.f32 %v317, 1.442695
  %v319 = vpow.pop %v318
  %v320 = vadd.f32 %v319, 1.0
  %v321 = vrcp.pop %v320
  %v322 = vmul.f32 1.0, %v321
  %324 = vrot.lane.b32.xlu0 %v313, 64
  %v325 = vpop.permute.xlu0 %324
  %v327 = vmul.f32 %v322, %v325
  %329 = vrot.lane.b32.xlu0 %v327, 64
  %v330 = vpop.permute.xlu0 %329
  %v332 = vadd.f32 %v243, %v330
  %v333 = vtanh.pop %v332
  %v334 = vsub.f32 1.0, %v322
  %336 = vrot.lane.b32.xlu0 %v333, 96
  %v337 = vpop.permute.xlu0 %336
  %v339 = vmul.f32 %v334, %v337
  %v340 = vmul.f32 %v322, %v236
  %v341 = vadd.f32 %v339, %v340
  %343 = vrot.lane.b32.xlu0 %v341, 96
  %v344 = vpop.permute.xlu0 %343
  %346 = vst.msk [vmem:[#allocation3 + $0x2] sm:$0x3] %vm241, %v344
  %v347 = vld [vmem:[#allocation2 + $0x4] sm:$0x3]
  %v348 = vsel %vm137, %v344, 0
  %350 = vmatprep.subr.mxu0 0.0
  %351 = vmatpush1.msra.mxu0 0.0
  %352 = vmatprep.subr.mxu0 0.0
  %353 = vmatpush1.msra.mxu0 0.0
  %354 = vmatprep.subr.mxu0 0.0
  %355 = vmatpush1.msra.mxu0 0.0
  %356 = vmatprep.subr.mxu0 0.0
  %357 = vmatpush1.msra.mxu0 0.0
  %358 = vmatprep.subr.mxu0 0.0
  %359 = vmatpush1.msra.mxu0 0.0
  %360 = vmatprep.subr.mxu0 0.0
  %361 = vmatpush1.msra.mxu0 0.0
  %362 = vmatprep.subr.mxu0 0.0
  %363 = vmatpush1.msra.mxu0 0.0
  %364 = vmatprep.subr.mxu0 0.0
  %365 = vmatpush1.msra.mxu0 0.0
  %366 = vmatprep.subr.mxu0 0.0
  %367 = vmatpush1.msra.mxu0 0.0
  %368 = vmatprep.subr.mxu0 0.0
  %369 = vmatpush1.msra.mxu0 0.0
  %370 = vmatprep.subr.mxu0 0.0
  %371 = vmatpush1.msra.mxu0 0.0
  %372 = vmatprep.subr.mxu0 0.0
  %373 = vmatpush1.msra.mxu0 0.0
  %374 = vmatprep.subr.mxu0 0.0
  %375 = vmatpush1.msra.mxu0 %v128
  %376 = vmatprep.subr.mxu0 0.0
  %377 = vmatpush1.msra.mxu0 %v127
  %378 = vmatprep.subr.mxu0 0.0
  %379 = vmatpush1.msra.mxu0 %v126
  %380 = vmatprep.subr.mxu0 0.0
  %381 = vmatpush1.msra.mxu0 %v125
  %382 = vmatprep.subr.mxu0 0.0
  %383 = vmatpush2.msra.mxu0 0.0
  %384 = vmatprep.subr.mxu0 0.0
  %385 = vmatpush2.msra.mxu0 0.0
  %386 = vmatprep.subr.mxu0 0.0
  %387 = vmatpush2.msra.mxu0 0.0
  %388 = vmatprep.subr.mxu0 0.0
  %389 = vmatpush2.msra.mxu0 0.0
  %390 = vmatprep.subr.mxu0 0.0
  %391 = vmatpush2.msra.mxu0 0.0
  %392 = vmatprep.subr.mxu0 0.0
  %393 = vmatpush2.msra.mxu0 0.0
  %394 = vmatprep.subr.mxu0 0.0
  %395 = vmatpush2.msra.mxu0 0.0
  %396 = vmatprep.subr.mxu0 0.0
  %397 = vmatpush2.msra.mxu0 0.0
  %398 = vmatprep.subr.mxu0 0.0
  %399 = vmatpush2.msra.mxu0 0.0
  %400 = vmatprep.subr.mxu0 0.0
  %401 = vmatpush2.msra.mxu0 0.0
  %402 = vmatprep.subr.mxu0 0.0
  %403 = vmatpush2.msra.mxu0 0.0
  %404 = vmatprep.subr.mxu0 0.0
  %405 = vmatpush2.msra.mxu0 0.0
  %406 = vmatprep.subr.mxu0 0.0
  %407 = vmatpush2.msra.mxu0 0.0
  %408 = vmatprep.subr.mxu0 0.0
  %409 = vmatpush2.msra.mxu0 0.0
  %410 = vmatprep.subr.mxu0 0.0
  %411 = vmatpush2.msra.mxu0 0.0
  %412 = vmatprep.subr.mxu0 0.0
  %413 = vmatpush2.msra.mxu0 0.0
  %414 = vmatprep.mubr.f32.mxu0 0.0
  %415 = vmatmul.mubr.f32.gmra.mxu0 %v348
  %v416 = vpop.f32.mrf.mxu0
  %v417 = vadd.f32 %v134, %v416
  %v418 = vpop.f32.mrf.mxu0
  %419 = vdwg.mxu0
  %v420 = vadd.f32 %v347, %v417
  %v421 = vxor.u32 %v420, 2147483648
  %v422 = vmul.f32 %v421, 1.442695
  %v423 = vpow.pop %v422
  %v424 = vadd.f32 %v423, 1.0
  %v425 = vrcp.pop %v424
  %v426 = vmul.f32 1.0, %v425
  %428 = vrot.lane.b32.xlu0 %v417, 64
  %v429 = vpop.permute.xlu0 %428
  %v431 = vmul.f32 %v426, %v429
  %433 = vrot.lane.b32.xlu0 %v431, 64
  %v434 = vpop.permute.xlu0 %433
  %v436 = vadd.f32 %v347, %v434
  %v437 = vtanh.pop %v436
  %v438 = vsub.f32 1.0, %v426
  %440 = vrot.lane.b32.xlu0 %v437, 96
  %v441 = vpop.permute.xlu0 %440
  %v443 = vmul.f32 %v438, %v441
  %v444 = vmul.f32 %v426, %v341
  %v445 = vadd.f32 %v443, %v444
  %447 = vrot.lane.b32.xlu0 %v445, 96
  %v448 = vpop.permute.xlu0 %447
  %450 = vst.msk [vmem:[#allocation3 + $0x4] sm:$0x3] %vm241, %v448
  %v451 = vld [vmem:[#allocation2 + $0x6] sm:$0x3]
  %v452 = vsel %vm137, %v448, 0
  %454 = vmatprep.subr.mxu0 0.0
  %455 = vmatpush1.msra.mxu0 0.0
  %456 = vmatprep.subr.mxu0 0.0
  %457 = vmatpush1.msra.mxu0 0.0
  %458 = vmatprep.subr.mxu0 0.0
  %459 = vmatpush1.msra.mxu0 0.0
  %460 = vmatprep.subr.mxu0 0.0
  %461 = vmatpush1.msra.mxu0 0.0
  %462 = vmatprep.subr.mxu0 0.0
  %463 = vmatpush1.msra.mxu0 0.0
  %464 = vmatprep.subr.mxu0 0.0
  %465 = vmatpush1.msra.mxu0 0.0
  %466 = vmatprep.subr.mxu0 0.0
  %467 = vmatpush1.msra.mxu0 0.0
  %468 = vmatprep.subr.mxu0 0.0
  %469 = vmatpush1.msra.mxu0 0.0
  %470 = vmatprep.subr.mxu0 0.0
  %471 = vmatpush1.msra.mxu0 0.0
  %472 = vmatprep.subr.mxu0 0.0
  %473 = vmatpush1.msra.mxu0 0.0
  %474 = vmatprep.subr.mxu0 0.0
  %475 = vmatpush1.msra.mxu0 0.0
  %476 = vmatprep.subr.mxu0 0.0
  %477 = vmatpush1.msra.mxu0 0.0
  %478 = vmatprep.subr.mxu0 0.0
  %479 = vmatpush1.msra.mxu0 %v128
  %480 = vmatprep.subr.mxu0 0.0
  %481 = vmatpush1.msra.mxu0 %v127
  %482 = vmatprep.subr.mxu0 0.0
  %483 = vmatpush1.msra.mxu0 %v126
  %484 = vmatprep.subr.mxu0 0.0
  %485 = vmatpush1.msra.mxu0 %v125
  %486 = vmatprep.subr.mxu0 0.0
  %487 = vmatpush2.msra.mxu0 0.0
  %488 = vmatprep.subr.mxu0 0.0
  %489 = vmatpush2.msra.mxu0 0.0
  %490 = vmatprep.subr.mxu0 0.0
  %491 = vmatpush2.msra.mxu0 0.0
  %492 = vmatprep.subr.mxu0 0.0
  %493 = vmatpush2.msra.mxu0 0.0
  %494 = vmatprep.subr.mxu0 0.0
  %495 = vmatpush2.msra.mxu0 0.0
  %496 = vmatprep.subr.mxu0 0.0
  %497 = vmatpush2.msra.mxu0 0.0
  %498 = vmatprep.subr.mxu0 0.0
  %499 = vmatpush2.msra.mxu0 0.0
  %500 = vmatprep.subr.mxu0 0.0
  %501 = vmatpush2.msra.mxu0 0.0
  %502 = vmatprep.subr.mxu0 0.0
  %503 = vmatpush2.msra.mxu0 0.0
  %504 = vmatprep.subr.mxu0 0.0
  %505 = vmatpush2.msra.mxu0 0.0
  %506 = vmatprep.subr.mxu0 0.0
  %507 = vmatpush2.msra.mxu0 0.0
  %508 = vmatprep.subr.mxu0 0.0
  %509 = vmatpush2.msra.mxu0 0.0
  %510 = vmatprep.subr.mxu0 0.0
  %511 = vmatpush2.msra.mxu0 0.0
  %512 = vmatprep.subr.mxu0 0.0
  %513 = vmatpush2.msra.mxu0 0.0
  %514 = vmatprep.subr.mxu0 0.0
  %515 = vmatpush2.msra.mxu0 0.0
  %516 = vmatprep.subr.mxu0 0.0
  %517 = vmatpush2.msra.mxu0 0.0
  %518 = vmatprep.mubr.f32.mxu0 0.0
  %519 = vmatmul.mubr.f32.gmra.mxu0 %v452
  %v520 = vpop.f32.mrf.mxu0
  %v521 = vadd.f32 %v134, %v520
  %v522 = vpop.f32.mrf.mxu0
  %523 = vdwg.mxu0
  %v524 = vadd.f32 %v451, %v521
  %v525 = vxor.u32 %v524, 2147483648
  %v526 = vmul.f32 %v525, 1.442695
  %v527 = vpow.pop %v526
  %v528 = vadd.f32 %v527, 1.0
  %v529 = vrcp.pop %v528
  %v530 = vmul.f32 1.0, %v529
  %532 = vrot.lane.b32.xlu0 %v521, 64
  %v533 = vpop.permute.xlu0 %532
  %v535 = vmul.f32 %v530, %v533
  %537 = vrot.lane.b32.xlu0 %v535, 64
  %v538 = vpop.permute.xlu0 %537
  %v540 = vadd.f32 %v451, %v538
  %v541 = vtanh.pop %v540
  %v542 = vsub.f32 1.0, %v530
  %544 = vrot.lane.b32.xlu0 %v541, 96
  %v545 = vpop.permute.xlu0 %544
  %v547 = vmul.f32 %v542, %v545
  %v548 = vmul.f32 %v530, %v445
  %v549 = vadd.f32 %v547, %v548
  %551 = vrot.lane.b32.xlu0 %v549, 96
  %v552 = vpop.permute.xlu0 %551
  %554 = vst.msk [vmem:[#allocation3 + $0x6] sm:$0x3] %vm241, %v552
  %v555 = vld [vmem:[#allocation2 + $0x8] sm:$0x3]
  %v556 = vsel %vm137, %v552, 0
  %558 = vmatprep.subr.mxu0 0.0
  %559 = vmatpush1.msra.mxu0 0.0
  %560 = vmatprep.subr.mxu0 0.0
  %561 = vmatpush1.msra.mxu0 0.0
  %562 = vmatprep.subr.mxu0 0.0
  %563 = vmatpush1.msra.mxu0 0.0
  %564 = vmatprep.subr.mxu0 0.0
  %565 = vmatpush1.msra.mxu0 0.0
  %566 = vmatprep.subr.mxu0 0.0
  %567 = vmatpush1.msra.mxu0 0.0
  %568 = vmatprep.subr.mxu0 0.0
  %569 = vmatpush1.msra.mxu0 0.0
  %570 = vmatprep.subr.mxu0 0.0
  %571 = vmatpush1.msra.mxu0 0.0
  %572 = vmatprep.subr.mxu0 0.0
  %573 = vmatpush1.msra.mxu0 0.0
  %574 = vmatprep.subr.mxu0 0.0
  %575 = vmatpush1.msra.mxu0 0.0
  %576 = vmatprep.subr.mxu0 0.0
  %577 = vmatpush1.msra.mxu0 0.0
  %578 = vmatprep.subr.mxu0 0.0
  %579 = vmatpush1.msra.mxu0 0.0
  %580 = vmatprep.subr.mxu0 0.0
  %581 = vmatpush1.msra.mxu0 0.0
  %582 = vmatprep.subr.mxu0 0.0
  %583 = vmatpush1.msra.mxu0 %v128
  %584 = vmatprep.subr.mxu0 0.0
  %585 = vmatpush1.msra.mxu0 %v127
  %586 = vmatprep.subr.mxu0 0.0
  %587 = vmatpush1.msra.mxu0 %v126
  %588 = vmatprep.subr.mxu0 0.0
  %589 = vmatpush1.msra.mxu0 %v125
  %590 = vmatprep.subr.mxu0 0.0
  %591 = vmatpush2.msra.mxu0 0.0
  %592 = vmatprep.subr.mxu0 0.0
  %593 = vmatpush2.msra.mxu0 0.0
  %594 = vmatprep.subr.mxu0 0.0
  %595 = vmatpush2.msra.mxu0 0.0
  %596 = vmatprep.subr.mxu0 0.0
  %597 = vmatpush2.msra.mxu0 0.0
  %598 = vmatprep.subr.mxu0 0.0
  %599 = vmatpush2.msra.mxu0 0.0
  %600 = vmatprep.subr.mxu0 0.0
  %601 = vmatpush2.msra.mxu0 0.0
  %602 = vmatprep.subr.mxu0 0.0
  %603 = vmatpush2.msra.mxu0 0.0
  %604 = vmatprep.subr.mxu0 0.0
  %605 = vmatpush2.msra.mxu0 0.0
  %606 = vmatprep.subr.mxu0 0.0
  %607 = vmatpush2.msra.mxu0 0.0
  %608 = vmatprep.subr.mxu0 0.0
  %609 = vmatpush2.msra.mxu0 0.0
  %610 = vmatprep.subr.mxu0 0.0
  %611 = vmatpush2.msra.mxu0 0.0
  %612 = vmatprep.subr.mxu0 0.0
  %613 = vmatpush2.msra.mxu0 0.0
  %614 = vmatprep.subr.mxu0 0.0
  %615 = vmatpush2.msra.mxu0 0.0
  %616 = vmatprep.subr.mxu0 0.0
  %617 = vmatpush2.msra.mxu0 0.0
  %618 = vmatprep.subr.mxu0 0.0
  %619 = vmatpush2.msra.mxu0 0.0
  %620 = vmatprep.subr.mxu0 0.0
  %621 = vmatpush2.msra.mxu0 0.0
  %622 = vmatprep.mubr.f32.mxu0 0.0
  %623 = vmatmul.mubr.f32.gmra.mxu0 %v556
  %v624 = vpop.f32.mrf.mxu0
  %v625 = vadd.f32 %v134, %v624
  %v626 = vpop.f32.mrf.mxu0
  %627 = vdwg.mxu0
  %v628 = vadd.f32 %v555, %v625
  %v629 = vxor.u32 %v628, 2147483648
  %v630 = vmul.f32 %v629, 1.442695
  %v631 = vpow.pop %v630
  %v632 = vadd.f32 %v631, 1.0
  %v633 = vrcp.pop %v632
  %v634 = vmul.f32 1.0, %v633
  %636 = vrot.lane.b32.xlu0 %v625, 64
  %v637 = vpop.permute.xlu0 %636
  %v639 = vmul.f32 %v634, %v637
  %641 = vrot.lane.b32.xlu0 %v639, 64
  %v642 = vpop.permute.xlu0 %641
  %v644 = vadd.f32 %v555, %v642
  %v645 = vtanh.pop %v644
  %v646 = vsub.f32 1.0, %v634
  %648 = vrot.lane.b32.xlu0 %v645, 96
  %v649 = vpop.permute.xlu0 %648
  %v651 = vmul.f32 %v646, %v649
  %v652 = vmul.f32 %v634, %v549
  %v653 = vadd.f32 %v651, %v652
  %655 = vrot.lane.b32.xlu0 %v653, 96
  %v656 = vpop.permute.xlu0 %655
  %658 = vst.msk [vmem:[#allocation3 + $0x8] sm:$0x3] %vm241, %v656
  %v659 = vld [vmem:[#allocation2 + $0xa] sm:$0x3]
  %v660 = vsel %vm137, %v656, 0
  %662 = vmatprep.subr.mxu0 0.0
  %663 = vmatpush1.msra.mxu0 0.0
  %664 = vmatprep.subr.mxu0 0.0
  %665 = vmatpush1.msra.mxu0 0.0
  %666 = vmatprep.subr.mxu0 0.0
  %667 = vmatpush1.msra.mxu0 0.0
  %668 = vmatprep.subr.mxu0 0.0
  %669 = vmatpush1.msra.mxu0 0.0
  %670 = vmatprep.subr.mxu0 0.0
  %671 = vmatpush1.msra.mxu0 0.0
  %672 = vmatprep.subr.mxu0 0.0
  %673 = vmatpush1.msra.mxu0 0.0
  %674 = vmatprep.subr.mxu0 0.0
  %675 = vmatpush1.msra.mxu0 0.0
  %676 = vmatprep.subr.mxu0 0.0
  %677 = vmatpush1.msra.mxu0 0.0
  %678 = vmatprep.subr.mxu0 0.0
  %679 = vmatpush1.msra.mxu0 0.0
  %680 = vmatprep.subr.mxu0 0.0
  %681 = vmatpush1.msra.mxu0 0.0
  %682 = vmatprep.subr.mxu0 0.0
  %683 = vmatpush1.msra.mxu0 0.0
  %684 = vmatprep.subr.mxu0 0.0
  %685 = vmatpush1.msra.mxu0 0.0
  %686 = vmatprep.subr.mxu0 0.0
  %687 = vmatpush1.msra.mxu0 %v128
  %688 = vmatprep.subr.mxu0 0.0
  %689 = vmatpush1.msra.mxu0 %v127
  %690 = vmatprep.subr.mxu0 0.0
  %691 = vmatpush1.msra.mxu0 %v126
  %692 = vmatprep.subr.mxu0 0.0
  %693 = vmatpush1.msra.mxu0 %v125
  %694 = vmatprep.subr.mxu0 0.0
  %695 = vmatpush2.msra.mxu0 0.0
  %696 = vmatprep.subr.mxu0 0.0
  %697 = vmatpush2.msra.mxu0 0.0
  %698 = vmatprep.subr.mxu0 0.0
  %699 = vmatpush2.msra.mxu0 0.0
  %700 = vmatprep.subr.mxu0 0.0
  %701 = vmatpush2.msra.mxu0 0.0
  %702 = vmatprep.subr.mxu0 0.0
  %703 = vmatpush2.msra.mxu0 0.0
  %704 = vmatprep.subr.mxu0 0.0
  %705 = vmatpush2.msra.mxu0 0.0
  %706 = vmatprep.subr.mxu0 0.0
  %707 = vmatpush2.msra.mxu0 0.0
  %708 = vmatprep.subr.mxu0 0.0
  %709 = vmatpush2.msra.mxu0 0.0
  %710 = vmatprep.subr.mxu0 0.0
  %711 = vmatpush2.msra.mxu0 0.0
  %712 = vmatprep.subr.mxu0 0.0
  %713 = vmatpush2.msra.mxu0 0.0
  %714 = vmatprep.subr.mxu0 0.0
  %715 = vmatpush2.msra.mxu0 0.0
  %716 = vmatprep.subr.mxu0 0.0
  %717 = vmatpush2.msra.mxu0 0.0
  %718 = vmatprep.subr.mxu0 0.0
  %719 = vmatpush2.msra.mxu0 0.0
  %720 = vmatprep.subr.mxu0 0.0
  %721 = vmatpush2.msra.mxu0 0.0
  %722 = vmatprep.subr.mxu0 0.0
  %723 = vmatpush2.msra.mxu0 0.0
  %724 = vmatprep.subr.mxu0 0.0
  %725 = vmatpush2.msra.mxu0 0.0
  %726 = vmatprep.mubr.f32.mxu0 0.0
  %727 = vmatmul.mubr.f32.gmra.mxu0 %v660
  %v728 = vpop.f32.mrf.mxu0
  %v729 = vadd.f32 %v134, %v728
  %v730 = vpop.f32.mrf.mxu0
  %731 = vdwg.mxu0
  %v732 = vadd.f32 %v659, %v729
  %v733 = vxor.u32 %v732, 2147483648
  %v734 = vmul.f32 %v733, 1.442695
  %v735 = vpow.pop %v734
  %v736 = vadd.f32 %v735, 1.0
  %v737 = vrcp.pop %v736
  %v738 = vmul.f32 1.0, %v737
  %740 = vrot.lane.b32.xlu0 %v729, 64
  %v741 = vpop.permute.xlu0 %740
  %v743 = vmul.f32 %v738, %v741
  %745 = vrot.lane.b32.xlu0 %v743, 64
  %v746 = vpop.permute.xlu0 %745
  %v748 = vadd.f32 %v659, %v746
  %v749 = vtanh.pop %v748
  %v750 = vsub.f32 1.0, %v738
  %752 = vrot.lane.b32.xlu0 %v749, 96
  %v753 = vpop.permute.xlu0 %752
  %v755 = vmul.f32 %v750, %v753
  %v756 = vmul.f32 %v738, %v653
  %v757 = vadd.f32 %v755, %v756
  %759 = vrot.lane.b32.xlu0 %v757, 96
  %v760 = vpop.permute.xlu0 %759
  %762 = vst.msk [vmem:[#allocation3 + $0xa] sm:$0x3] %vm241, %v760
  %v763 = vld [vmem:[#allocation2 + $0xc] sm:$0x3]
  %v764 = vsel %vm137, %v760, 0
  %766 = vmatprep.subr.mxu0 0.0
  %767 = vmatpush1.msra.mxu0 0.0
  %768 = vmatprep.subr.mxu0 0.0
  %769 = vmatpush1.msra.mxu0 0.0
  %770 = vmatprep.subr.mxu0 0.0
  %771 = vmatpush1.msra.mxu0 0.0
  %772 = vmatprep.subr.mxu0 0.0
  %773 = vmatpush1.msra.mxu0 0.0
  %774 = vmatprep.subr.mxu0 0.0
  %775 = vmatpush1.msra.mxu0 0.0
  %776 = vmatprep.subr.mxu0 0.0
  %777 = vmatpush1.msra.mxu0 0.0
  %778 = vmatprep.subr.mxu0 0.0
  %779 = vmatpush1.msra.mxu0 0.0
  %780 = vmatprep.subr.mxu0 0.0
  %781 = vmatpush1.msra.mxu0 0.0
  %782 = vmatprep.subr.mxu0 0.0
  %783 = vmatpush1.msra.mxu0 0.0
  %784 = vmatprep.subr.mxu0 0.0
  %785 = vmatpush1.msra.mxu0 0.0
  %786 = vmatprep.subr.mxu0 0.0
  %787 = vmatpush1.msra.mxu0 0.0
  %788 = vmatprep.subr.mxu0 0.0
  %789 = vmatpush1.msra.mxu0 0.0
  %790 = vmatprep.subr.mxu0 0.0
  %791 = vmatpush1.msra.mxu0 %v128
  %792 = vmatprep.subr.mxu0 0.0
  %793 = vmatpush1.msra.mxu0 %v127
  %794 = vmatprep.subr.mxu0 0.0
  %795 = vmatpush1.msra.mxu0 %v126
  %796 = vmatprep.subr.mxu0 0.0
  %797 = vmatpush1.msra.mxu0 %v125
  %798 = vmatprep.subr.mxu0 0.0
  %799 = vmatpush2.msra.mxu0 0.0
  %800 = vmatprep.subr.mxu0 0.0
  %801 = vmatpush2.msra.mxu0 0.0
  %802 = vmatprep.subr.mxu0 0.0
  %803 = vmatpush2.msra.mxu0 0.0
  %804 = vmatprep.subr.mxu0 0.0
  %805 = vmatpush2.msra.mxu0 0.0
  %806 = vmatprep.subr.mxu0 0.0
  %807 = vmatpush2.msra.mxu0 0.0
  %808 = vmatprep.subr.mxu0 0.0
  %809 = vmatpush2.msra.mxu0 0.0
  %810 = vmatprep.subr.mxu0 0.0
  %811 = vmatpush2.msra.mxu0 0.0
  %812 = vmatprep.subr.mxu0 0.0
  %813 = vmatpush2.msra.mxu0 0.0
  %814 = vmatprep.subr.mxu0 0.0
  %815 = vmatpush2.msra.mxu0 0.0
  %816 = vmatprep.subr.mxu0 0.0
  %817 = vmatpush2.msra.mxu0 0.0
  %818 = vmatprep.subr.mxu0 0.0
  %819 = vmatpush2.msra.mxu0 0.0
  %820 = vmatprep.subr.mxu0 0.0
  %821 = vmatpush2.msra.mxu0 0.0
  %822 = vmatprep.subr.mxu0 0.0
  %823 = vmatpush2.msra.mxu0 0.0
  %824 = vmatprep.subr.mxu0 0.0
  %825 = vmatpush2.msra.mxu0 0.0
  %826 = vmatprep.subr.mxu0 0.0
  %827 = vmatpush2.msra.mxu0 0.0
  %828 = vmatprep.subr.mxu0 0.0
  %829 = vmatpush2.msra.mxu0 0.0
  %830 = vmatprep.mubr.f32.mxu0 0.0
  %831 = vmatmul.mubr.f32.gmra.mxu0 %v764
  %v832 = vpop.f32.mrf.mxu0
  %v833 = vadd.f32 %v134, %v832
  %v834 = vpop.f32.mrf.mxu0
  %835 = vdwg.mxu0
  %v836 = vadd.f32 %v763, %v833
  %v837 = vxor.u32 %v836, 2147483648
  %v838 = vmul.f32 %v837, 1.442695
  %v839 = vpow.pop %v838
  %v840 = vadd.f32 %v839, 1.0
  %v841 = vrcp.pop %v840
  %v842 = vmul.f32 1.0, %v841
  %844 = vrot.lane.b32.xlu0 %v833, 64
  %v845 = vpop.permute.xlu0 %844
  %v847 = vmul.f32 %v842, %v845
  %849 = vrot.lane.b32.xlu0 %v847, 64
  %v850 = vpop.permute.xlu0 %849
  %v852 = vadd.f32 %v763, %v850
  %v853 = vtanh.pop %v852
  %v854 = vsub.f32 1.0, %v842
  %856 = vrot.lane.b32.xlu0 %v853, 96
  %v857 = vpop.permute.xlu0 %856
  %v859 = vmul.f32 %v854, %v857
  %v860 = vmul.f32 %v842, %v757
  %v861 = vadd.f32 %v859, %v860
  %863 = vrot.lane.b32.xlu0 %v861, 96
  %v864 = vpop.permute.xlu0 %863
  %866 = vst.msk [vmem:[#allocation3 + $0xc] sm:$0x3] %vm241, %v864
  %v867 = vld [vmem:[#allocation2 + $0xe] sm:$0x3]
  %v868 = vsel %vm137, %v864, 0
  %870 = vmatprep.subr.mxu0 0.0
  %871 = vmatpush1.msra.mxu0 0.0
  %872 = vmatprep.subr.mxu0 0.0
  %873 = vmatpush1.msra.mxu0 0.0
  %874 = vmatprep.subr.mxu0 0.0
  %875 = vmatpush1.msra.mxu0 0.0
  %876 = vmatprep.subr.mxu0 0.0
  %877 = vmatpush1.msra.mxu0 0.0
  %878 = vmatprep.subr.mxu0 0.0
  %879 = vmatpush1.msra.mxu0 0.0
  %880 = vmatprep.subr.mxu0 0.0
  %881 = vmatpush1.msra.mxu0 0.0
  %882 = vmatprep.subr.mxu0 0.0
  %883 = vmatpush1.msra.mxu0 0.0
  %884 = vmatprep.subr.mxu0 0.0
  %885 = vmatpush1.msra.mxu0 0.0
  %886 = vmatprep.subr.mxu0 0.0
  %887 = vmatpush1.msra.mxu0 0.0
  %888 = vmatprep.subr.mxu0 0.0
  %889 = vmatpush1.msra.mxu0 0.0
  %890 = vmatprep.subr.mxu0 0.0
  %891 = vmatpush1.msra.mxu0 0.0
  %892 = vmatprep.subr.mxu0 0.0
  %893 = vmatpush1.msra.mxu0 0.0
  %894 = vmatprep.subr.mxu0 0.0
  %895 = vmatpush1.msra.mxu0 %v128
  %896 = vmatprep.subr.mxu0 0.0
  %897 = vmatpush1.msra.mxu0 %v127
  %898 = vmatprep.subr.mxu0 0.0
  %899 = vmatpush1.msra.mxu0 %v126
  %900 = vmatprep.subr.mxu0 0.0
  %901 = vmatpush1.msra.mxu0 %v125
  %902 = vmatprep.subr.mxu0 0.0
  %903 = vmatpush2.msra.mxu0 0.0
  %904 = vmatprep.subr.mxu0 0.0
  %905 = vmatpush2.msra.mxu0 0.0
  %906 = vmatprep.subr.mxu0 0.0
  %907 = vmatpush2.msra.mxu0 0.0
  %908 = vmatprep.subr.mxu0 0.0
  %909 = vmatpush2.msra.mxu0 0.0
  %910 = vmatprep.subr.mxu0 0.0
  %911 = vmatpush2.msra.mxu0 0.0
  %912 = vmatprep.subr.mxu0 0.0
  %913 = vmatpush2.msra.mxu0 0.0
  %914 = vmatprep.subr.mxu0 0.0
  %915 = vmatpush2.msra.mxu0 0.0
  %916 = vmatprep.subr.mxu0 0.0
  %917 = vmatpush2.msra.mxu0 0.0
  %918 = vmatprep.subr.mxu0 0.0
  %919 = vmatpush2.msra.mxu0 0.0
  %920 = vmatprep.subr.mxu0 0.0
  %921 = vmatpush2.msra.mxu0 0.0
  %922 = vmatprep.subr.mxu0 0.0
  %923 = vmatpush2.msra.mxu0 0.0
  %924 = vmatprep.subr.mxu0 0.0
  %925 = vmatpush2.msra.mxu0 0.0
  %926 = vmatprep.subr.mxu0 0.0
  %927 = vmatpush2.msra.mxu0 0.0
  %928 = vmatprep.subr.mxu0 0.0
  %929 = vmatpush2.msra.mxu0 0.0
  %930 = vmatprep.subr.mxu0 0.0
  %931 = vmatpush2.msra.mxu0 0.0
  %932 = vmatprep.subr.mxu0 0.0
  %933 = vmatpush2.msra.mxu0 0.0
  %934 = vmatprep.mubr.f32.mxu0 0.0
  %935 = vmatmul.mubr.f32.gmra.mxu0 %v868
  %v936 = vpop.f32.mrf.mxu0
  %v937 = vadd.f32 %v134, %v936
  %v938 = vpop.f32.mrf.mxu0
  %939 = vdwg.mxu0
  %v940 = vadd.f32 %v867, %v937
  %v941 = vxor.u32 %v940, 2147483648
  %v942 = vmul.f32 %v941, 1.442695
  %v943 = vpow.pop %v942
  %v944 = vadd.f32 %v943, 1.0
  %v945 = vrcp.pop %v944
  %v946 = vmul.f32 1.0, %v945
  %948 = vrot.lane.b32.xlu0 %v937, 64
  %v949 = vpop.permute.xlu0 %948
  %v951 = vmul.f32 %v946, %v949
  %953 = vrot.lane.b32.xlu0 %v951, 64
  %v954 = vpop.permute.xlu0 %953
  %v956 = vadd.f32 %v867, %v954
  %v957 = vtanh.pop %v956
  %v958 = vsub.f32 1.0, %v946
  %960 = vrot.lane.b32.xlu0 %v957, 96
  %v961 = vpop.permute.xlu0 %960
  %v963 = vmul.f32 %v958, %v961
  %v964 = vmul.f32 %v946, %v861
  %v965 = vadd.f32 %v963, %v964
  %967 = vrot.lane.b32.xlu0 %v965, 96
  %v968 = vpop.permute.xlu0 %967
  %970 = vst.msk [vmem:[#allocation3 + $0xe] sm:$0x3] %vm241, %v968
  %v971 = vld [vmem:[#allocation3] sm:$0xff]
  %v972 = vld [vmem:[#allocation3 + $0x8] sm:$0xff]
  %v973 = vld [vmem:[%s5] sm:$0xff]
  %v974 = vld [vmem:[%s5 + $0x8] sm:$0xff]
  %v975 = vld [vmem:[%s5 + $0x10] sm:$0xff]
  %v976 = vld [vmem:[%s5 + $0x18] sm:$0xff]
  %v977 = vld [vmem:[%s6] sm:$0x1]
  %v979 = vlaneseq
  %v980 = vshrl.u32 %v979, 7
  %v981 = vsub.s32 0, %v980
  %v982 = vrot.slane %v977, %v981
  %v985 = vsel %vm137, %v971, 0
  %v988 = vsel %vm137, %v972, 0
  %990 = vmatprep.subr.mxu0 0.0
  %991 = vmatpush1.msra.mxu0 0.0
  %992 = vmatprep.subr.mxu0 0.0
  %993 = vmatpush1.msra.mxu0 0.0
  %994 = vmatprep.subr.mxu0 0.0
  %995 = vmatpush1.msra.mxu0 0.0
  %996 = vmatprep.subr.mxu0 0.0
  %997 = vmatpush1.msra.mxu0 0.0
  %998 = vmatprep.subr.mxu0 0.0
  %999 = vmatpush1.msra.mxu0 0.0
  %1000 = vmatprep.subr.mxu0 0.0
  %1001 = vmatpush1.msra.mxu0 0.0
  %1002 = vmatprep.subr.mxu0 0.0
  %1003 = vmatpush1.msra.mxu0 0.0
  %1004 = vmatprep.subr.mxu0 0.0
  %1005 = vmatpush1.msra.mxu0 0.0
  %1006 = vmatprep.subr.mxu0 0.0
  %1007 = vmatpush1.msra.mxu0 0.0
  %1008 = vmatprep.subr.mxu0 0.0
  %1009 = vmatpush1.msra.mxu0 0.0
  %1010 = vmatprep.subr.mxu0 0.0
  %1011 = vmatpush1.msra.mxu0 0.0
  %1012 = vmatprep.subr.mxu0 0.0
  %1013 = vmatpush1.msra.mxu0 0.0
  %1014 = vmatprep.subr.mxu0 0.0
  %1015 = vmatpush1.msra.mxu0 %v976
  %1016 = vmatprep.subr.mxu0 0.0
  %1017 = vmatpush1.msra.mxu0 %v975
  %1018 = vmatprep.subr.mxu0 0.0
  %1019 = vmatpush1.msra.mxu0 %v974
  %1020 = vmatprep.subr.mxu0 0.0
  %1021 = vmatpush1.msra.mxu0 %v973
  %1022 = vmatprep.subr.mxu0 0.0
  %1023 = vmatpush2.msra.mxu0 0.0
  %1024 = vmatprep.subr.mxu0 0.0
  %1025 = vmatpush2.msra.mxu0 0.0
  %1026 = vmatprep.subr.mxu0 0.0
  %1027 = vmatpush2.msra.mxu0 0.0
  %1028 = vmatprep.subr.mxu0 0.0
  %1029 = vmatpush2.msra.mxu0 0.0
  %1030 = vmatprep.subr.mxu0 0.0
  %1031 = vmatpush2.msra.mxu0 0.0
  %1032 = vmatprep.subr.mxu0 0.0
  %1033 = vmatpush2.msra.mxu0 0.0
  %1034 = vmatprep.subr.mxu0 0.0
  %1035 = vmatpush2.msra.mxu0 0.0
  %1036 = vmatprep.subr.mxu0 0.0
  %1037 = vmatpush2.msra.mxu0 0.0
  %1038 = vmatprep.subr.mxu0 0.0
  %1039 = vmatpush2.msra.mxu0 0.0
  %1040 = vmatprep.subr.mxu0 0.0
  %1041 = vmatpush2.msra.mxu0 0.0
  %1042 = vmatprep.subr.mxu0 0.0
  %1043 = vmatpush2.msra.mxu0 0.0
  %1044 = vmatprep.subr.mxu0 0.0
  %1045 = vmatpush2.msra.mxu0 0.0
  %1046 = vmatprep.subr.mxu0 0.0
  %1047 = vmatpush2.msra.mxu0 0.0
  %1048 = vmatprep.subr.mxu0 0.0
  %1049 = vmatpush2.msra.mxu0 0.0
  %1050 = vmatprep.subr.mxu0 0.0
  %1051 = vmatpush2.msra.mxu0 0.0
  %1052 = vmatprep.subr.mxu0 0.0
  %1053 = vmatpush2.msra.mxu0 0.0
  %1054 = vmatprep.mubr.f32.mxu0 0.0
  %1055 = vmatmul.mubr.f32.gmra.mxu0 %v985
  %v1056 = vpop.f32.mrf.mxu0
  %v1057 = vadd.f32 %v982, %v1056
  %v1058 = vpop.f32.mrf.mxu0
  %1059 = vmatprep.mubr.f32.mxu0 0.0
  %1060 = vmatmul.mubr.f32.gmra.mxu0 %v988
  %v1061 = vpop.f32.mrf.mxu0
  %v1062 = vadd.f32 %v982, %v1061
  %v1063 = vpop.f32.mrf.mxu0
  %1064 = vdwg.mxu0
  %1065 = vst.msk [vmem:[%s7] sm:$0xff] %vm36, %v1057
  %1066 = vst.msk [vmem:[%s7 + $0x8] sm:$0xff] %vm36, %v1062
  // Predicated region
  $region30: #{decoder_forward.1} parent=0 // pred_check
    _
  $region31: #{decoder_forward.1} parent=0 // pred_check_branch
    %1068 = sbr.rel (0) target = $region33
  $region32: #{decoder_forward.1} parent=0 // pred_region
    _
  $region33: #{decoder_forward.1} parent=0 // pred_fallthru
    _
  // Predicated region
  $region34: #{decoder_forward.1} parent=0 // pred_check
    _
  $region35: #{decoder_forward.1} parent=0 // pred_check_branch
    %1070 = sbr.rel (0) target = $region37
  $region36: #{decoder_forward.1} parent=0 // pred_region
    _
  $region37: #{decoder_forward.1} parent=0 // pred_fallthru
    _

</llo_original>
